<compile_context>
chip_gen: v7x
topology: tpu7x:2x2x1
jax: 0.10.0
libtpu: 0.0.40
codegen_flags: <defaults>
</compile_context>

<pallas_src>
import functools
import math

import jax
import jax.numpy as jnp
from jax import lax
from jax.experimental import pallas as pl
from jax.experimental.pallas import tpu as pltpu


# --------------------------------------------------------------------------------------
# Kernel body: fused QKV + per-head attention + softmax + attention@V + projection.
# --------------------------------------------------------------------------------------
def _mha_body(x_ref, wqkv_ref, wp_ref, bias_ref, bproj_ref,
              out_ref, attn_ref, heads_scratch, *,
              num_heads, head_size, scale, compute_dtype):
    H, hs = num_heads, head_size
    Hhs = H * hs

    x = x_ref[0].astype(compute_dtype)                       # (T, C)

    # Grid-invariant operands: cast ONCE (hoisted out of the head loop).
    wqkv = wqkv_ref[...].astype(compute_dtype)               # (C, 3*H*hs)
    wp = wp_ref[...].astype(compute_dtype)                   # (C, H*hs) PyTorch layout
    bias = bias_ref[...]                                     # (T, T) f32: alibi*scale + causal mask

    # Single fused QKV matmul (f32 accumulation on the MXU).
    qkv = jnp.dot(x, wqkv, preferred_element_type=jnp.float32)     # (T, 3*H*hs)
    # Fold the 1/sqrt(C) scale into Q once (cheaper than scaling (T,T) per head).
    q_all = (qkv[:, 0 * Hhs:1 * Hhs] * scale).astype(compute_dtype)
    k_all = qkv[:, 1 * Hhs:2 * Hhs].astype(compute_dtype)
    v_all = qkv[:, 2 * Hhs:3 * Hhs].astype(compute_dtype)

    for h in range(H):                                       # static unroll, H is small
        sl = slice(h * hs, (h + 1) * hs)
        q = q_all[:, sl]                                     # (T, hs)
        k = k_all[:, sl]
        v = v_all[:, sl]

        # scores = (q*scale) @ k^T  (contract over head_size)
        scores = lax.dot_general(q, k, (((1,), (1,)), ((), ())),
                                 preferred_element_type=jnp.float32)    # (T, T)
        scores = scores + bias                               # alibi*scale + causal mask

        # Numerically-stable, exactly-normalized softmax in f32.
        m = jnp.max(scores, axis=-1, keepdims=True)
        e = jnp.exp(scores - m)
        attn = e / jnp.sum(e, axis=-1, keepdims=True)

        if attn_ref is not None:
            attn_ref[0, h] = attn.astype(attn_ref.dtype)

        out_h = jnp.dot(attn.astype(compute_dtype), v,
                        preferred_element_type=jnp.float32)  # (T, hs)
        # Write straight into the fused-heads scratch: no list, no lane concat.
        heads_scratch[:, sl] = out_h.astype(heads_scratch.dtype)

    heads = heads_scratch[...]                               # (T, H*hs)
    # Output projection: single matmul with K = H*hs; w_proj kept in its native
    # PyTorch (C, H*hs) layout (MXU reads the transposed operand for free).
    out = lax.dot_general(heads, wp, (((1,), (1,)), ((), ())),
                          preferred_element_type=jnp.float32)           # (T, C)
    out = out + bproj_ref[...].astype(jnp.float32)           # broadcast (1, C)
    out_ref[0] = out.astype(out_ref.dtype)


# --------------------------------------------------------------------------------------
# One-time parameter prep
# --------------------------------------------------------------------------------------
def fuse_qkv_weights(wq_ph, wk_ph, wv_ph):
    """Per-head PyTorch nn.Linear weights (H, head_size, C) -> fused (C, 3*H*head_size).

    Column layout: [q_h0 .. q_h{H-1} | k_h0 .. | v_h0 ..], so x @ W_qkv yields all
    Q, K, V for every head in one matmul. Do this once at parameter-prep time.
    """
    def to_cols(w):
        H, hs, C = w.shape
        return jnp.transpose(w, (2, 0, 1)).reshape(C, H * hs)
    return jnp.concatenate([to_cols(wq_ph), to_cols(wk_ph), to_cols(wv_ph)], axis=1)


def _build_bias(T, C, embedding_strategy, mask):
    """Combined additive bias: alibi * C**-0.5 on the lower triangle, plus a large
    finite negative (instead of -inf, to avoid NaN on fully-masked rows) where masked."""
    row = jnp.arange(T, dtype=jnp.int32)[:, None]
    col = jnp.arange(T, dtype=jnp.int32)[None, :]
    lower = col <= row
    scale = float(C) ** (-0.5)
    bias = jnp.zeros((T, T), jnp.float32)
    if embedding_strategy == 'alibi':
        alibi = jnp.where(lower, (col - row).astype(jnp.float32), 0.0)
        bias = bias + alibi * scale
    if mask:
        bias = jnp.where(lower, bias, jnp.float32(-1e30))
    return bias


# --------------------------------------------------------------------------------------
# Wrapper
# --------------------------------------------------------------------------------------
def multiple_heads_forward(x, w_qkv, w_proj, b_proj, *, num_heads, head_size,
                           embedding_strategy='alibi', mask=True,
                           compute_dtype=jnp.float32, attn_dtype=jnp.float32,
                           return_attn=True):
    """x: (B, T, C); w_qkv: fused (C, 3*H*hs); w_proj: (C, H*hs) (PyTorch layout);
    b_proj: (C,).  Returns (result (B,T,C), attention maps (B,H,T,T) or None)."""
    B, T, C = x.shape
    H, hs = num_heads, head_size
    assert w_qkv.shape == (C, 3 * H * hs)
    assert w_proj.shape == (C, H * hs)

    bias = _build_bias(T, C, embedding_strategy, mask)
    b_proj_2d = b_proj.reshape(1, C)
    scale = float(C) ** (-0.5)

    body = functools.partial(_mha_body, num_heads=H, head_size=hs,
                             scale=scale, compute_dtype=compute_dtype)

    if return_attn:
        def kernel(x_ref, wqkv_ref, wp_ref, bias_ref, b_ref, out_ref, attn_ref, heads_sc):
            body(x_ref, wqkv_ref, wp_ref, bias_ref, b_ref, out_ref, attn_ref, heads_sc)
        out_shape = (jax.ShapeDtypeStruct((B, T, C), x.dtype),
                     jax.ShapeDtypeStruct((B, H, T, T), attn_dtype))
        out_specs = [pl.BlockSpec((1, T, C), lambda b: (b, 0, 0)),
                     pl.BlockSpec((1, H, T, T), lambda b: (b, 0, 0, 0))]
    else:
        def kernel(x_ref, wqkv_ref, wp_ref, bias_ref, b_ref, out_ref, heads_sc):
            body(x_ref, wqkv_ref, wp_ref, bias_ref, b_ref, out_ref, None, heads_sc)
        out_shape = jax.ShapeDtypeStruct((B, T, C), x.dtype)
        out_specs = pl.BlockSpec((1, T, C), lambda b: (b, 0, 0))

    def vmem_resident():
        # Whole-array, single-copy VMEM residency for grid-invariant operands
        # (no per-step re-blocking, no double-buffered second copy).
        return pl.BlockSpec(memory_space=pltpu.MemorySpace.VMEM)

    in_specs = [
        pl.BlockSpec((1, T, C), lambda b: (b, 0, 0)),   # x: one batch element per step
        vmem_resident(),                                # fused W_qkv (C, 3*H*hs)
        vmem_resident(),                                # W_proj (C, H*hs)
        vmem_resident(),                                # combined alibi+mask bias (T, T)
        vmem_resident(),                                # projection bias (1, C)
    ]

    outs = pl.pallas_call(
        kernel,
        out_shape=out_shape,
        grid_spec=pltpu.PrefetchScalarGridSpec(
            num_scalar_prefetch=0,
            grid=(B,),                                  # batch-parallel; >=2 steps keeps both v7x TCs busy
            in_specs=in_specs,
            out_specs=out_specs,
            scratch_shapes=[pltpu.VMEM((T, H * hs), compute_dtype)],  # fused head outputs
        ),
        compiler_params=pltpu.CompilerParams(
            dimension_semantics=("parallel",)),
    )(x, w_qkv, w_proj, bias, b_proj_2d)

    # Dropout(p=0.1) in eval mode == identity.
    if return_attn:
        result, attn_maps = outs
        return result, attn_maps
    return outs, None


# --------------------------------------------------------------------------------------
# Pure-JAX reference (mirrors the PyTorch forward) for a sanity check.
# --------------------------------------------------------------------------------------
def _reference_forward(x, wq_ph, wk_ph, wv_ph, w_proj, b_proj,
                       embedding_strategy, mask):
    B, T, C = x.shape
    H, hs, _ = wq_ph.shape
    row = jnp.arange(T)[:, None]
    col = jnp.arange(T)[None, :]
    alibi = jnp.where(col <= row, (col - row).astype(jnp.float32), 0.0)
    outs, attns = [], []
    for h in range(H):
        q = x @ wq_ph[h].T
        k = x @ wk_ph[h].T
        v = x @ wv_ph[h].T
        scores = jnp.einsum('btd,bsd->bts', q, k)
        if embedding_strategy == 'alibi':
            scores = (scores + alibi) * (C ** -0.5)
        else:
            scores = scores * (C ** -0.5)
        if mask:
            scores = jnp.where(col <= row, scores, -jnp.inf)
        attn = jax.nn.softmax(scores, axis=-1)
        outs.append(attn @ v)
        attns.append(attn)
    all_heads = jnp.concatenate(outs, axis=-1)
    result = all_heads @ w_proj.T + b_proj
    return result, jnp.stack(attns, axis=1)   # (B, H, T, T)


# --------------------------------------------------------------------------------------
if __name__ == "__main__":
    # Small shapes consistent with the module.
    B, T = 2, 8
    n_embd = 32
    num_heads = 4
    head_size = 8
    embedding_strategy = 'alibi'
    mask = True

    key = jax.random.PRNGKey(0)
    kx, kq, kk, kv, kw, kb = jax.random.split(key, 6)

    x = jax.random.normal(kx, (B, T, n_embd), dtype=jnp.float32)

    # nn.Linear(n_embd, head_size, bias=False): weight is (head_size, n_embd) per head.
    bound_qkv = 1.0 / math.sqrt(n_embd)
    wq_ph = jax.random.uniform(kq, (num_heads, head_size, n_embd),
                               minval=-bound_qkv, maxval=bound_qkv, dtype=jnp.float32)
    wk_ph = jax.random.uniform(kk, (num_heads, head_size, n_embd),
                               minval=-bound_qkv, maxval=bound_qkv, dtype=jnp.float32)
    wv_ph = jax.random.uniform(kv, (num_heads, head_size, n_embd),
                               minval=-bound_qkv, maxval=bound_qkv, dtype=jnp.float32)

    # nn.Linear(num_heads*head_size, n_embd): weight (n_embd, H*hs), bias (n_embd,).
    bound_p = 1.0 / math.sqrt(num_heads * head_size)
    w_proj = jax.random.uniform(kw, (n_embd, num_heads * head_size),
                                minval=-bound_p, maxval=bound_p, dtype=jnp.float32)
    b_proj = jax.random.uniform(kb, (n_embd,),
                                minval=-bound_p, maxval=bound_p, dtype=jnp.float32)

    # One-time parameter prep: fuse Q/K/V weights into a single (C, 3*H*hs) matrix.
    w_qkv = fuse_qkv_weights(wq_ph, wk_ph, wv_ph)

    ref_result, ref_attns = _reference_forward(
        x, wq_ph, wk_ph, wv_ph, w_proj, b_proj, embedding_strategy, mask)

    # ---------------- f32 compute path (tight reference check) ----------------
    result, attn_maps = multiple_heads_forward(
        x, w_qkv, w_proj, b_proj,
        num_heads=num_heads, head_size=head_size,
        embedding_strategy=embedding_strategy, mask=mask,
        compute_dtype=jnp.float32, attn_dtype=jnp.float32, return_attn=True)
    result = jax.block_until_ready(result)
    attn_maps = jax.block_until_ready(attn_maps)

    assert jnp.allclose(result, ref_result, atol=1e-3, rtol=1e-3)
    assert jnp.allclose(attn_maps, ref_attns, atol=1e-3, rtol=1e-3)

    # ---------------- no-attention-map path (skips the O(H*T^2) writeback) ----
    result_na, attn_na = multiple_heads_forward(
        x, w_qkv, w_proj, b_proj,
        num_heads=num_heads, head_size=head_size,
        embedding_strategy=embedding_strategy, mask=mask,
        compute_dtype=jnp.float32, return_attn=False)
    result_na = jax.block_until_ready(result_na)
    assert attn_na is None
    assert jnp.allclose(result_na, result, atol=1e-5, rtol=1e-5)

    # ---------------- bf16 MXU-input path (f32 accumulation), loose check -----
    result_bf, attn_bf = multiple_heads_forward(
        x, w_qkv, w_proj, b_proj,
        num_heads=num_heads, head_size=head_size,
        embedding_strategy=embedding_strategy, mask=mask,
        compute_dtype=jnp.bfloat16, attn_dtype=jnp.bfloat16, return_attn=True)
    result_bf = jax.block_until_ready(result_bf)
    attn_bf = jax.block_until_ready(attn_bf)
    assert jnp.allclose(result_bf, ref_result, atol=5e-2, rtol=5e-2)
    assert jnp.allclose(attn_bf.astype(jnp.float32), ref_attns, atol=5e-2, rtol=5e-2)

    print("KERNEL_OK")
</pallas_src>

<mosaic_0001>
module attributes {stable_mosaic.version = 11 : i64} {
  func.func @kernel(%arg0: i32, %arg1: memref<1x8x32xf32, #tpu.memory_space<vmem>>, %arg2: memref<32x96xf32, #tpu.memory_space<vmem>>, %arg3: memref<32x32xf32, #tpu.memory_space<vmem>>, %arg4: memref<8x8xf32, #tpu.memory_space<vmem>>, %arg5: memref<1x32xf32, #tpu.memory_space<vmem>>, %arg6: memref<1x8x32xf32, #tpu.memory_space<vmem>>, %arg7: memref<1x4x8x8xf32, #tpu.memory_space<vmem>>, %arg8: memref<8x32xf32, #tpu.memory_space<vmem>>) attributes {dimension_semantics = [#tpu.dimension_semantics<parallel>], iteration_bounds = array<i64: 2>, scalar_prefetch = 0 : i64, scratch_operands = 1 : i64, tpu.core_type = #tpu.core_type<tc>, window_params = [{transform_indices = @transform_0, window_bounds = array<i64: 1, 8, 32>}, {pipeline_mode = #tpu.pipeline_mode<synchronous>, transform_indices = @transform_1, window_bounds = array<i64: 32, 96>}, {pipeline_mode = #tpu.pipeline_mode<synchronous>, transform_indices = @transform_2, window_bounds = array<i64: 32, 32>}, {pipeline_mode = #tpu.pipeline_mode<synchronous>, transform_indices = @transform_3, window_bounds = array<i64: 8, 8>}, {pipeline_mode = #tpu.pipeline_mode<synchronous>, transform_indices = @transform_4, window_bounds = array<i64: 1, 32>}, {transform_indices = @transform_5, window_bounds = array<i64: 1, 8, 32>}, {transform_indices = @transform_6, window_bounds = array<i64: 1, 4, 8, 8>}]} {
    %c0 = arith.constant 0 : index
    %c0_0 = arith.constant 0 : index
    %c0_1 = arith.constant 0 : index
    %0 = vector.load %arg1[%c0, %c0_0, %c0_1] : memref<1x8x32xf32, #tpu.memory_space<vmem>>, vector<1x8x32xf32>
    %1 = vector.shape_cast %0 : vector<1x8x32xf32> to vector<8x32xf32>
    %c0_2 = arith.constant 0 : index
    %c0_3 = arith.constant 0 : index
    %2 = vector.load %arg2[%c0_2, %c0_3] : memref<32x96xf32, #tpu.memory_space<vmem>>, vector<32x96xf32>
    %c0_4 = arith.constant 0 : index
    %c0_5 = arith.constant 0 : index
    %3 = vector.load %arg3[%c0_4, %c0_5] : memref<32x32xf32, #tpu.memory_space<vmem>>, vector<32x32xf32>
    %c0_6 = arith.constant 0 : index
    %c0_7 = arith.constant 0 : index
    %4 = vector.load %arg4[%c0_6, %c0_7] : memref<8x8xf32, #tpu.memory_space<vmem>>, vector<8x8xf32>
    %cst = arith.constant dense<0.000000e+00> : vector<8x96xf32>
    %5 = tpu.matmul %1, %2, %cst {dimension_numbers = #tpu.dot_dimension_numbers<[1], [0], [0], [1], [0, 0, 1, 1], [], []>} : vector<8x32xf32>, vector<32x96xf32>, vector<8x96xf32> -> vector<8x96xf32>
    %6 = vector.extract_strided_slice %5 {offsets = [0, 0], sizes = [8, 32], strides = [1, 1]} : vector<8x96xf32> to vector<8x32xf32>
    %cst_8 = arith.constant 0.176776692 : f32
    %7 = vector.broadcast %cst_8 : f32 to vector<8x32xf32>
    %8 = arith.mulf %6, %7 : vector<8x32xf32>
    %9 = vector.extract_strided_slice %5 {offsets = [0, 32], sizes = [8, 32], strides = [1, 1]} : vector<8x96xf32> to vector<8x32xf32>
    %10 = vector.extract_strided_slice %5 {offsets = [0, 64], sizes = [8, 32], strides = [1, 1]} : vector<8x96xf32> to vector<8x32xf32>
    %11 = vector.extract_strided_slice %8 {offsets = [0, 0], sizes = [8, 8], strides = [1, 1]} : vector<8x32xf32> to vector<8x8xf32>
    %12 = vector.extract_strided_slice %9 {offsets = [0, 0], sizes = [8, 8], strides = [1, 1]} : vector<8x32xf32> to vector<8x8xf32>
    %13 = vector.extract_strided_slice %10 {offsets = [0, 0], sizes = [8, 8], strides = [1, 1]} : vector<8x32xf32> to vector<8x8xf32>
    %cst_9 = arith.constant dense<0.000000e+00> : vector<8x8xf32>
    %14 = tpu.matmul %11, %12, %cst_9 {dimension_numbers = #tpu.dot_dimension_numbers<[1], [1], [0], [0], [0, 0, 1, 0], [], []>} : vector<8x8xf32>, vector<8x8xf32>, vector<8x8xf32> -> vector<8x8xf32>
    %15 = arith.addf %14, %4 : vector<8x8xf32>
    %cst_10 = arith.constant dense<0xFF800000> : vector<8xf32>
    %16 = vector.multi_reduction <maximumf>, %15, %cst_10 [1] : vector<8x8xf32> to vector<8xf32>
    %17 = vector.shape_cast %16 : vector<8xf32> to vector<8x1xf32>
    %18 = vector.broadcast %17 : vector<8x1xf32> to vector<8x8xf32>
    %19 = arith.subf %15, %18 : vector<8x8xf32>
    %20 = math.exp %19 : vector<8x8xf32>
    %cst_11 = arith.constant dense<0.000000e+00> : vector<8xf32>
    %21 = vector.multi_reduction <add>, %20, %cst_11 [1] : vector<8x8xf32> to vector<8xf32>
    %22 = vector.shape_cast %21 : vector<8xf32> to vector<8x1xf32>
    %23 = vector.broadcast %22 : vector<8x1xf32> to vector<8x8xf32>
    %24 = arith.divf %20, %23 : vector<8x8xf32>
    %c0_12 = arith.constant 0 : index
    %c0_13 = arith.constant 0 : index
    %c0_14 = arith.constant 0 : index
    %c0_15 = arith.constant 0 : index
    %25 = vector.load %arg7[%c0_12, %c0_13, %c0_14, %c0_15] : memref<1x4x8x8xf32, #tpu.memory_space<vmem>>, vector<1x1x8x8xf32>
    %26 = vector.shape_cast %25 : vector<1x1x8x8xf32> to vector<8x8xf32>
    %27 = vector.shape_cast %24 : vector<8x8xf32> to vector<1x1x8x8xf32>
    tpu.vector_store %arg7[%c0_12, %c0_13, %c0_14, %c0_15], %27 {strides = array<i32>} : memref<1x4x8x8xf32, #tpu.memory_space<vmem>>, vector<1x1x8x8xf32>,
    %cst_16 = arith.constant dense<0.000000e+00> : vector<8x8xf32>
    %28 = tpu.matmul %24, %13, %cst_16 {dimension_numbers = #tpu.dot_dimension_numbers<[1], [0], [0], [1], [0, 0, 1, 1], [], []>} : vector<8x8xf32>, vector<8x8xf32>, vector<8x8xf32> -> vector<8x8xf32>
    %c0_17 = arith.constant 0 : index
    %c0_18 = arith.constant 0 : index
    %29 = vector.load %arg8[%c0_17, %c0_18] : memref<8x32xf32, #tpu.memory_space<vmem>>, vector<8x8xf32>
    tpu.vector_store %arg8[%c0_17, %c0_18], %28 {strides = array<i32>} : memref<8x32xf32, #tpu.memory_space<vmem>>, vector<8x8xf32>,
    %30 = vector.extract_strided_slice %8 {offsets = [0, 8], sizes = [8, 8], strides = [1, 1]} : vector<8x32xf32> to vector<8x8xf32>
    %31 = vector.extract_strided_slice %9 {offsets = [0, 8], sizes = [8, 8], strides = [1, 1]} : vector<8x32xf32> to vector<8x8xf32>
    %32 = vector.extract_strided_slice %10 {offsets = [0, 8], sizes = [8, 8], strides = [1, 1]} : vector<8x32xf32> to vector<8x8xf32>
    %cst_19 = arith.constant dense<0.000000e+00> : vector<8x8xf32>
    %33 = tpu.matmul %30, %31, %cst_19 {dimension_numbers = #tpu.dot_dimension_numbers<[1], [1], [0], [0], [0, 0, 1, 0], [], []>} : vector<8x8xf32>, vector<8x8xf32>, vector<8x8xf32> -> vector<8x8xf32>
    %34 = arith.addf %33, %4 : vector<8x8xf32>
    %cst_20 = arith.constant dense<0xFF800000> : vector<8xf32>
    %35 = vector.multi_reduction <maximumf>, %34, %cst_20 [1] : vector<8x8xf32> to vector<8xf32>
    %36 = vector.shape_cast %35 : vector<8xf32> to vector<8x1xf32>
    %37 = vector.broadcast %36 : vector<8x1xf32> to vector<8x8xf32>
    %38 = arith.subf %34, %37 : vector<8x8xf32>
    %39 = math.exp %38 : vector<8x8xf32>
    %cst_21 = arith.constant dense<0.000000e+00> : vector<8xf32>
    %40 = vector.multi_reduction <add>, %39, %cst_21 [1] : vector<8x8xf32> to vector<8xf32>
    %41 = vector.shape_cast %40 : vector<8xf32> to vector<8x1xf32>
    %42 = vector.broadcast %41 : vector<8x1xf32> to vector<8x8xf32>
    %43 = arith.divf %39, %42 : vector<8x8xf32>
    %c0_22 = arith.constant 0 : index
    %c1 = arith.constant 1 : index
    %c0_23 = arith.constant 0 : index
    %c0_24 = arith.constant 0 : index
    %44 = vector.load %arg7[%c0_22, %c1, %c0_23, %c0_24] : memref<1x4x8x8xf32, #tpu.memory_space<vmem>>, vector<1x1x8x8xf32>
    %45 = vector.shape_cast %44 : vector<1x1x8x8xf32> to vector<8x8xf32>
    %46 = vector.shape_cast %43 : vector<8x8xf32> to vector<1x1x8x8xf32>
    tpu.vector_store %arg7[%c0_22, %c1, %c0_23, %c0_24], %46 {strides = array<i32>} : memref<1x4x8x8xf32, #tpu.memory_space<vmem>>, vector<1x1x8x8xf32>,
    %cst_25 = arith.constant dense<0.000000e+00> : vector<8x8xf32>
    %47 = tpu.matmul %43, %32, %cst_25 {dimension_numbers = #tpu.dot_dimension_numbers<[1], [0], [0], [1], [0, 0, 1, 1], [], []>} : vector<8x8xf32>, vector<8x8xf32>, vector<8x8xf32> -> vector<8x8xf32>
    %c0_26 = arith.constant 0 : index
    %c8 = arith.constant 8 : index
    %48 = vector.load %arg8[%c0_26, %c8] : memref<8x32xf32, #tpu.memory_space<vmem>>, vector<8x8xf32>
    tpu.vector_store %arg8[%c0_26, %c8], %47 {strides = array<i32>} : memref<8x32xf32, #tpu.memory_space<vmem>>, vector<8x8xf32>,
    %49 = vector.extract_strided_slice %8 {offsets = [0, 16], sizes = [8, 8], strides = [1, 1]} : vector<8x32xf32> to vector<8x8xf32>
    %50 = vector.extract_strided_slice %9 {offsets = [0, 16], sizes = [8, 8], strides = [1, 1]} : vector<8x32xf32> to vector<8x8xf32>
    %51 = vector.extract_strided_slice %10 {offsets = [0, 16], sizes = [8, 8], strides = [1, 1]} : vector<8x32xf32> to vector<8x8xf32>
    %cst_27 = arith.constant dense<0.000000e+00> : vector<8x8xf32>
    %52 = tpu.matmul %49, %50, %cst_27 {dimension_numbers = #tpu.dot_dimension_numbers<[1], [1], [0], [0], [0, 0, 1, 0], [], []>} : vector<8x8xf32>, vector<8x8xf32>, vector<8x8xf32> -> vector<8x8xf32>
    %53 = arith.addf %52, %4 : vector<8x8xf32>
    %cst_28 = arith.constant dense<0xFF800000> : vector<8xf32>
    %54 = vector.multi_reduction <maximumf>, %53, %cst_28 [1] : vector<8x8xf32> to vector<8xf32>
    %55 = vector.shape_cast %54 : vector<8xf32> to vector<8x1xf32>
    %56 = vector.broadcast %55 : vector<8x1xf32> to vector<8x8xf32>
    %57 = arith.subf %53, %56 : vector<8x8xf32>
    %58 = math.exp %57 : vector<8x8xf32>
    %cst_29 = arith.constant dense<0.000000e+00> : vector<8xf32>
    %59 = vector.multi_reduction <add>, %58, %cst_29 [1] : vector<8x8xf32> to vector<8xf32>
    %60 = vector.shape_cast %59 : vector<8xf32> to vector<8x1xf32>
    %61 = vector.broadcast %60 : vector<8x1xf32> to vector<8x8xf32>
    %62 = arith.divf %58, %61 : vector<8x8xf32>
    %c0_30 = arith.constant 0 : index
    %c2 = arith.constant 2 : index
    %c0_31 = arith.constant 0 : index
    %c0_32 = arith.constant 0 : index
    %63 = vector.load %arg7[%c0_30, %c2, %c0_31, %c0_32] : memref<1x4x8x8xf32, #tpu.memory_space<vmem>>, vector<1x1x8x8xf32>
    %64 = vector.shape_cast %63 : vector<1x1x8x8xf32> to vector<8x8xf32>
    %65 = vector.shape_cast %62 : vector<8x8xf32> to vector<1x1x8x8xf32>
    tpu.vector_store %arg7[%c0_30, %c2, %c0_31, %c0_32], %65 {strides = array<i32>} : memref<1x4x8x8xf32, #tpu.memory_space<vmem>>, vector<1x1x8x8xf32>,
    %cst_33 = arith.constant dense<0.000000e+00> : vector<8x8xf32>
    %66 = tpu.matmul %62, %51, %cst_33 {dimension_numbers = #tpu.dot_dimension_numbers<[1], [0], [0], [1], [0, 0, 1, 1], [], []>} : vector<8x8xf32>, vector<8x8xf32>, vector<8x8xf32> -> vector<8x8xf32>
    %c0_34 = arith.constant 0 : index
    %c16 = arith.constant 16 : index
    %67 = vector.load %arg8[%c0_34, %c16] : memref<8x32xf32, #tpu.memory_space<vmem>>, vector<8x8xf32>
    tpu.vector_store %arg8[%c0_34, %c16], %66 {strides = array<i32>} : memref<8x32xf32, #tpu.memory_space<vmem>>, vector<8x8xf32>,
    %68 = vector.extract_strided_slice %8 {offsets = [0, 24], sizes = [8, 8], strides = [1, 1]} : vector<8x32xf32> to vector<8x8xf32>
    %69 = vector.extract_strided_slice %9 {offsets = [0, 24], sizes = [8, 8], strides = [1, 1]} : vector<8x32xf32> to vector<8x8xf32>
    %70 = vector.extract_strided_slice %10 {offsets = [0, 24], sizes = [8, 8], strides = [1, 1]} : vector<8x32xf32> to vector<8x8xf32>
    %cst_35 = arith.constant dense<0.000000e+00> : vector<8x8xf32>
    %71 = tpu.matmul %68, %69, %cst_35 {dimension_numbers = #tpu.dot_dimension_numbers<[1], [1], [0], [0], [0, 0, 1, 0], [], []>} : vector<8x8xf32>, vector<8x8xf32>, vector<8x8xf32> -> vector<8x8xf32>
    %72 = arith.addf %71, %4 : vector<8x8xf32>
    %cst_36 = arith.constant dense<0xFF800000> : vector<8xf32>
    %73 = vector.multi_reduction <maximumf>, %72, %cst_36 [1] : vector<8x8xf32> to vector<8xf32>
    %74 = vector.shape_cast %73 : vector<8xf32> to vector<8x1xf32>
    %75 = vector.broadcast %74 : vector<8x1xf32> to vector<8x8xf32>
    %76 = arith.subf %72, %75 : vector<8x8xf32>
    %77 = math.exp %76 : vector<8x8xf32>
    %cst_37 = arith.constant dense<0.000000e+00> : vector<8xf32>
    %78 = vector.multi_reduction <add>, %77, %cst_37 [1] : vector<8x8xf32> to vector<8xf32>
    %79 = vector.shape_cast %78 : vector<8xf32> to vector<8x1xf32>
    %80 = vector.broadcast %79 : vector<8x1xf32> to vector<8x8xf32>
    %81 = arith.divf %77, %80 : vector<8x8xf32>
    %c0_38 = arith.constant 0 : index
    %c3 = arith.constant 3 : index
    %c0_39 = arith.constant 0 : index
    %c0_40 = arith.constant 0 : index
    %82 = vector.load %arg7[%c0_38, %c3, %c0_39, %c0_40] : memref<1x4x8x8xf32, #tpu.memory_space<vmem>>, vector<1x1x8x8xf32>
    %83 = vector.shape_cast %82 : vector<1x1x8x8xf32> to vector<8x8xf32>
    %84 = vector.shape_cast %81 : vector<8x8xf32> to vector<1x1x8x8xf32>
    tpu.vector_store %arg7[%c0_38, %c3, %c0_39, %c0_40], %84 {strides = array<i32>} : memref<1x4x8x8xf32, #tpu.memory_space<vmem>>, vector<1x1x8x8xf32>,
    %cst_41 = arith.constant dense<0.000000e+00> : vector<8x8xf32>
    %85 = tpu.matmul %81, %70, %cst_41 {dimension_numbers = #tpu.dot_dimension_numbers<[1], [0], [0], [1], [0, 0, 1, 1], [], []>} : vector<8x8xf32>, vector<8x8xf32>, vector<8x8xf32> -> vector<8x8xf32>
    %c0_42 = arith.constant 0 : index
    %c24 = arith.constant 24 : index
    %86 = vector.load %arg8[%c0_42, %c24] : memref<8x32xf32, #tpu.memory_space<vmem>>, vector<8x8xf32>
    tpu.vector_store %arg8[%c0_42, %c24], %85 {strides = array<i32>} : memref<8x32xf32, #tpu.memory_space<vmem>>, vector<8x8xf32>,
    %c0_43 = arith.constant 0 : index
    %c0_44 = arith.constant 0 : index
    %87 = vector.load %arg8[%c0_43, %c0_44] : memref<8x32xf32, #tpu.memory_space<vmem>>, vector<8x32xf32>
    %cst_45 = arith.constant dense<0.000000e+00> : vector<8x32xf32>
    %88 = tpu.matmul %87, %3, %cst_45 {dimension_numbers = #tpu.dot_dimension_numbers<[1], [1], [0], [0], [0, 0, 1, 0], [], []>} : vector<8x32xf32>, vector<32x32xf32>, vector<8x32xf32> -> vector<8x32xf32>
    %c0_46 = arith.constant 0 : index
    %c0_47 = arith.constant 0 : index
    %89 = vector.load %arg5[%c0_46, %c0_47] : memref<1x32xf32, #tpu.memory_space<vmem>>, vector<1x32xf32>
    %90 = vector.broadcast %89 : vector<1x32xf32> to vector<8x32xf32>
    %91 = arith.addf %88, %90 : vector<8x32xf32>
    %c0_48 = arith.constant 0 : index
    %c0_49 = arith.constant 0 : index
    %c0_50 = arith.constant 0 : index
    %92 = vector.load %arg6[%c0_48, %c0_49, %c0_50] : memref<1x8x32xf32, #tpu.memory_space<vmem>>, vector<1x8x32xf32>
    %93 = vector.shape_cast %92 : vector<1x8x32xf32> to vector<8x32xf32>
    %94 = vector.shape_cast %91 : vector<8x32xf32> to vector<1x8x32xf32>
    tpu.vector_store %arg6[%c0_48, %c0_49, %c0_50], %94 {strides = array<i32>} : memref<1x8x32xf32, #tpu.memory_space<vmem>>, vector<1x8x32xf32>,
    return
  }
  func.func @transform_0(%arg0: i32) -> (i32, i32, i32) {
    %c0_i32 = arith.constant 0 : i32
    %c0_i32_0 = arith.constant 0 : i32
    %c0_i32_1 = arith.constant 0 : i32
    return %arg0, %c0_i32, %c0_i32_0 : i32, i32, i32
  }
  func.func @transform_1(%arg0: i32) -> (i32, i32) {
    %c0_i32 = arith.constant 0 : i32
    %c0_i32_0 = arith.constant 0 : i32
    %c0_i32_1 = arith.constant 0 : i32
    return %c0_i32, %c0_i32_0 : i32, i32
  }
  func.func @transform_2(%arg0: i32) -> (i32, i32) {
    %c0_i32 = arith.constant 0 : i32
    %c0_i32_0 = arith.constant 0 : i32
    %c0_i32_1 = arith.constant 0 : i32
    return %c0_i32, %c0_i32_0 : i32, i32
  }
  func.func @transform_3(%arg0: i32) -> (i32, i32) {
    %c0_i32 = arith.constant 0 : i32
    %c0_i32_0 = arith.constant 0 : i32
    %c0_i32_1 = arith.constant 0 : i32
    return %c0_i32, %c0_i32_0 : i32, i32
  }
  func.func @transform_4(%arg0: i32) -> (i32, i32) {
    %c0_i32 = arith.constant 0 : i32
    %c0_i32_0 = arith.constant 0 : i32
    %c0_i32_1 = arith.constant 0 : i32
    return %c0_i32, %c0_i32_0 : i32, i32
  }
  func.func @transform_5(%arg0: i32) -> (i32, i32, i32) {
    %c0_i32 = arith.constant 0 : i32
    %c0_i32_0 = arith.constant 0 : i32
    %c0_i32_1 = arith.constant 0 : i32
    return %arg0, %c0_i32, %c0_i32_0 : i32, i32, i32
  }
  func.func @transform_6(%arg0: i32) -> (i32, i32, i32, i32) {
    %c0_i32 = arith.constant 0 : i32
    %c0_i32_0 = arith.constant 0 : i32
    %c0_i32_1 = arith.constant 0 : i32
    %c0_i32_2 = arith.constant 0 : i32
    return %arg0, %c0_i32, %c0_i32_0, %c0_i32_1 : i32, i32, i32, i32
  }
}

</mosaic_0001>

<llo_original>
// kernel: tpu_custom_call.1
$region0: #{tpu_custom_call.1}
  #allocation0 [shape = 'u32[]', space=smem, size = 0x4, offset = 0x4, fixed_abs, tag = 'smem constant byte address 0x4 - core index']
  #allocation1 [shape = 'u32[144,128]{1,0:T(1,128)}', space=vmem, size = 0x12000, scoped, tag = 'internal scratch']
  #allocation2 [shape = 'f32[8,32]{1,0:T(8,128)}', space=vmem, size = 0x1000, scoped, tag = 'scratch operand']
  %s0 = inlined_call_operand.hbm [shape: f32[2,8,32], index: 0, kind: input, shape index: {}]
  %s1 = inlined_call_operand.hbm [shape: f32[32,96], index: 1, kind: input, shape index: {}]
  %s2 = inlined_call_operand.hbm [shape: f32[32,32], index: 2, kind: input, shape index: {}]
  %s3 = inlined_call_operand.vmem [shape: f32[8,8], index: 3, kind: input, shape index: {}]
  %s4 = inlined_call_operand.vmem [shape: f32[1,32], index: 4, kind: input, shape index: {}]
  %s5 = inlined_call_operand.hbm [shape: f32[2,8,32], index: 5, kind: output, shape index: {0}]
  %s6 = inlined_call_operand.hbm [shape: f32[2,4,8,8], index: 6, kind: output, shape index: {1}]
  %7 = xla_tuple %s5, %s6
  %s8 = sld [smem:[#allocation0]]
  $region73: #{tpu_custom_call.1} parent=0
    _
  %s10 = ssub.s32 1, %s8
  %s11 = scalar_select 0, %s10, %s8
  $region1: #{tpu_custom_call.1} parent=0
    #allocation3 [shape = 'u8[8192]{0}', space=vmem, size = 0x2000, scoped, tag = 'input window, operand 0']
    #allocation4 [shape = 's32[2]{0}', space=sflag, size = 0x8, scoped, tag = 'scoped memory for tpu_custom_call.1']
    #allocation5 [shape = 's32[2]{0}', space=sflag, size = 0x8, scoped, tag = 'scoped memory for tpu_custom_call.1']
    #allocation6 [shape = 'u8[16384]{0}', space=vmem, size = 0x4000, scoped, tag = 'input window, operand 1, single buffered']
    #allocation7 [shape = 's32[1]{0}', space=sflag, size = 0x4, scoped, tag = 'scoped memory for tpu_custom_call.1']
    #allocation8 [shape = 'u8[16384]{0}', space=vmem, size = 0x4000, scoped, tag = 'input window, operand 2, single buffered']
    #allocation9 [shape = 'u8[8192]{0}', space=vmem, size = 0x2000, scoped, tag = 'output window, operand 0']
    #allocation10 [shape = 'u8[32768]{0}', space=vmem, size = 0x8000, scoped, tag = 'output window, operand 1']
    #allocation11 [shape = 's32[2]{0}', space=sflag, size = 0x8, scoped, tag = 'scoped memory for tpu_custom_call.1']
    %12 = vsyncpa [#allocation4], 0
    %s13 = scalar_lea.sflag [#allocation4], 1
    %14 = vsyncpa %s13, 0
    %15 = vsyncpa [#allocation7], 0
    %16 = vsyncpa [#allocation5], 0
    %s17 = scalar_lea.sflag [#allocation5], 1
    %18 = vsyncpa %s17, 0
    %19 = vsyncpa [#allocation11], 0
    %s20 = scalar_lea.sflag [#allocation11], 1
    %21 = vsyncpa %s20, 0
    loop: start=0, step=1, limit=4
    $region2: #{tpu_custom_call.1} parent=1 // loop_pre_header
      _
    $region3: #{tpu_custom_call.1} parent=1 // loop_header
      %s23 = sphi 0, %s27
      %p24 = scmp.ge.s32.totalorder %s23, 4
      %s33 = sphi 0, %s35
      %s36 = sphi 0, %s33
      %s37 = sphi 0, %s36
      %s53 = sphi 0, %s37
      %s57 = sphi 0, %s57
      %s59 = sphi 0, %s57
      %s60 = sphi 0, %s59
      %s74 = sphi 0, %s60
      %s78 = sphi 0, %s78
      %s80 = sphi 0, %s78
      %s81 = sphi 0, %s80
      %s95 = sphi 0, %s81
      %s99 = sphi 0, %s99
      %s101 = sphi 0, %s99
      %s102 = sphi 0, %s101
      %s116 = sphi 0, %s102
      %s120 = sphi 0, %s120
      %s122 = sphi 0, %s120
      %s123 = sphi 0, %s122
      %s137 = sphi 0, %s123
      %s143 = sphi 0, %s145
      %s146 = sphi 0, %s143
      %s147 = sphi 0, %s146
      %s163 = sphi 0, %s147
      %s169 = sphi 0, %s171
      %s172 = sphi 0, %s169
      %s173 = sphi 0, %s172
      %s189 = sphi 0, %s173
    $region4: #{tpu_custom_call.1} parent=1 // loop_header_branch
      %26 = sbr.rel (%p24) target = $region8
    $region5: #{tpu_custom_call.1} parent=1 // loop_body
      %s28 = ssub.s32 %s23, 1
      %s29 = ssub.s32 %s23, 2
      %s30 = sadd.s32 %s23, 1
      %s31 = ssub.s32 %s23, %s30
      %p32 = scmp.eq.s32.totalorder %s31, 0
      %s34 = sadd.s32 %s33, 1
      %s35 = scalar_select %p32, %s33, %s34
      %p38 = pneg %p32
      %p39 = scmp.eq.s32.totalorder %s23, 1
      %p40 = por %p38, %p39
      %p41 = scmp.ne.s32.totalorder %s33, %s36
      %p42 = scmp.eq.s32.totalorder %s23, 0
      %p43 = por %p41, %p42
      %p44 = scmp.ne.s32.totalorder %s33, %s36
      %p45 = scmp.eq.s32.totalorder %s28, 1
      %p46 = por %p44, %p45
      %p47 = scmp.ne.s32.totalorder %s36, %s37
      %p48 = scmp.eq.s32.totalorder %s28, 0
      %p49 = por %p47, %p48
      %p50 = scmp.ne.s32.totalorder %s36, %s37
      %p51 = scmp.eq.s32.totalorder %s29, 1
      %p52 = por %p50, %p51
      %p54 = scmp.ne.s32.totalorder %s37, %s53
      %p55 = scmp.eq.s32.totalorder %s29, 0
      %p56 = por %p54, %p55
      %s58 = sadd.s32 %s57, 1
      %p61 = scmp.eq.s32.totalorder %s23, 1
      %p62 = scmp.ne.s32.totalorder %s57, %s59
      %p63 = scmp.eq.s32.totalorder %s23, 0
      %p64 = por %p62, %p63
      %p65 = scmp.ne.s32.totalorder %s57, %s59
      %p66 = scmp.eq.s32.totalorder %s28, 1
      %p67 = por %p65, %p66
      %p68 = scmp.ne.s32.totalorder %s59, %s60
      %p69 = scmp.eq.s32.totalorder %s28, 0
      %p70 = por %p68, %p69
      %p71 = scmp.ne.s32.totalorder %s59, %s60
      %p72 = scmp.eq.s32.totalorder %s29, 1
      %p73 = por %p71, %p72
      %p75 = scmp.ne.s32.totalorder %s60, %s74
      %p76 = scmp.eq.s32.totalorder %s29, 0
      %p77 = por %p75, %p76
      %s79 = sadd.s32 %s78, 1
      %p82 = scmp.eq.s32.totalorder %s23, 1
      %p83 = scmp.ne.s32.totalorder %s78, %s80
      %p84 = scmp.eq.s32.totalorder %s23, 0
      %p85 = por %p83, %p84
      %p86 = scmp.ne.s32.totalorder %s78, %s80
      %p87 = scmp.eq.s32.totalorder %s28, 1
      %p88 = por %p86, %p87
      %p89 = scmp.ne.s32.totalorder %s80, %s81
      %p90 = scmp.eq.s32.totalorder %s28, 0
      %p91 = por %p89, %p90
      %p92 = scmp.ne.s32.totalorder %s80, %s81
      %p93 = scmp.eq.s32.totalorder %s29, 1
      %p94 = por %p92, %p93
      %p96 = scmp.ne.s32.totalorder %s81, %s95
      %p97 = scmp.eq.s32.totalorder %s29, 0
      %p98 = por %p96, %p97
      %s100 = sadd.s32 %s99, 1
      %p103 = scmp.eq.s32.totalorder %s23, 1
      %p104 = scmp.ne.s32.totalorder %s99, %s101
      %p105 = scmp.eq.s32.totalorder %s23, 0
      %p106 = por %p104, %p105
      %p107 = scmp.ne.s32.totalorder %s99, %s101
      %p108 = scmp.eq.s32.totalorder %s28, 1
      %p109 = por %p107, %p108
      %p110 = scmp.ne.s32.totalorder %s101, %s102
      %p111 = scmp.eq.s32.totalorder %s28, 0
      %p112 = por %p110, %p111
      %p113 = scmp.ne.s32.totalorder %s101, %s102
      %p114 = scmp.eq.s32.totalorder %s29, 1
      %p115 = por %p113, %p114
      %p117 = scmp.ne.s32.totalorder %s102, %s116
      %p118 = scmp.eq.s32.totalorder %s29, 0
      %p119 = por %p117, %p118
      %s121 = sadd.s32 %s120, 1
      %p124 = scmp.eq.s32.totalorder %s23, 1
      %p125 = scmp.ne.s32.totalorder %s120, %s122
      %p126 = scmp.eq.s32.totalorder %s23, 0
      %p127 = por %p125, %p126
      %p128 = scmp.ne.s32.totalorder %s120, %s122
      %p129 = scmp.eq.s32.totalorder %s28, 1
      %p130 = por %p128, %p129
      %p131 = scmp.ne.s32.totalorder %s122, %s123
      %p132 = scmp.eq.s32.totalorder %s28, 0
      %p133 = por %p131, %p132
      %p134 = scmp.ne.s32.totalorder %s122, %s123
      %p135 = scmp.eq.s32.totalorder %s29, 1
      %p136 = por %p134, %p135
      %p138 = scmp.ne.s32.totalorder %s123, %s137
      %p139 = scmp.eq.s32.totalorder %s29, 0
      %p140 = por %p138, %p139
      %s141 = ssub.s32 %s23, %s30
      %p142 = scmp.eq.s32.totalorder %s141, 0
      %s144 = sadd.s32 %s143, 1
      %s145 = scalar_select %p142, %s143, %s144
      %p148 = pneg %p142
      %p149 = scmp.eq.s32.totalorder %s23, 1
      %p150 = por %p148, %p149
      %p151 = scmp.ne.s32.totalorder %s143, %s146
      %p152 = scmp.eq.s32.totalorder %s23, 0
      %p153 = por %p151, %p152
      %p154 = scmp.ne.s32.totalorder %s143, %s146
      %p155 = scmp.eq.s32.totalorder %s28, 1
      %p156 = por %p154, %p155
      %p157 = scmp.ne.s32.totalorder %s146, %s147
      %p158 = scmp.eq.s32.totalorder %s28, 0
      %p159 = por %p157, %p158
      %p160 = scmp.ne.s32.totalorder %s146, %s147
      %p161 = scmp.eq.s32.totalorder %s29, 1
      %p162 = por %p160, %p161
      %p164 = scmp.ne.s32.totalorder %s147, %s163
      %p165 = scmp.eq.s32.totalorder %s29, 0
      %p166 = por %p164, %p165
      %s167 = ssub.s32 %s23, %s30
      %p168 = scmp.eq.s32.totalorder %s167, 0
      %s170 = sadd.s32 %s169, 1
      %s171 = scalar_select %p168, %s169, %s170
      %p174 = pneg %p168
      %p175 = scmp.eq.s32.totalorder %s23, 1
      %p176 = por %p174, %p175
      %p177 = scmp.ne.s32.totalorder %s169, %s172
      %p178 = scmp.eq.s32.totalorder %s23, 0
      %p179 = por %p177, %p178
      %p180 = scmp.ne.s32.totalorder %s169, %s172
      %p181 = scmp.eq.s32.totalorder %s28, 1
      %p182 = por %p180, %p181
      %p183 = scmp.ne.s32.totalorder %s172, %s173
      %p184 = scmp.eq.s32.totalorder %s28, 0
      %p185 = por %p183, %p184
      %p186 = scmp.ne.s32.totalorder %s172, %s173
      %p187 = scmp.eq.s32.totalorder %s29, 1
      %p188 = por %p186, %p187
      %p190 = scmp.ne.s32.totalorder %s173, %s189
      %p191 = scmp.eq.s32.totalorder %s29, 0
      %p192 = por %p190, %p191
      %p193 = scmp.le.s32.totalorder 1, %s23
      %p194 = scmp.lt.s32.totalorder %s23, 3
      %p195 = pnand %p193, %p194
      %p196 = pneg %p195
      // Predicated region
      $region9: #{tpu_custom_call.1} parent=5 // pred_check
        _
      $region10: #{tpu_custom_call.1} parent=5 // pred_check_branch
        %198 = sbr.rel (%p195) target = $region12
      $region11: #{tpu_custom_call.1} parent=5 // pred_region
        %s199 = ssub.s32 %s23, 1
        // Predicated region
        $region13: #{tpu_custom_call.1} parent=11 // pred_check
          %p200 = pneg %p70
        $region14: #{tpu_custom_call.1} parent=11 // pred_check_branch
          %202 = sbr.rel (%p200) target = $region16
        $region15: #{tpu_custom_call.1} parent=11 // pred_region
          %s204 = ssub.s32 512, 512
          %205 = vsyncadd [#allocation7], %s204
          %s206 = sshll.u32 [#allocation6], 4
          %s207 = int_to_ptr.vmem [resolvable:$true] %s206
          %212 = dma.hbm_to_vmem [thread:$0]  %s1, 512, %s207, [#allocation7], 128, 128, 8
        $region16: #{tpu_custom_call.1} parent=11 // pred_fallthru
          _
        // Predicated region
        $region17: #{tpu_custom_call.1} parent=11 // pred_check
          %p213 = pneg %p91
        $region18: #{tpu_custom_call.1} parent=11 // pred_check_branch
          %215 = sbr.rel (%p213) target = $region20
        $region19: #{tpu_custom_call.1} parent=11 // pred_region
          %s217 = ssub.s32 512, 512
          %218 = vsyncadd [#allocation7], %s217
          %s219 = sshll.u32 [#allocation8], 4
          %s220 = int_to_ptr.vmem [resolvable:$true] %s219
          %225 = dma.hbm_to_vmem [thread:$0]  %s2, 512, %s220, [#allocation7], 128, 128, 8
        $region20: #{tpu_custom_call.1} parent=11 // pred_fallthru
          _
        // Predicated region
        $region21: #{tpu_custom_call.1} parent=11 // pred_check
          %p226 = pneg %p112
        $region22: #{tpu_custom_call.1} parent=11 // pred_check_branch
          %228 = sbr.rel (%p226) target = $region24
        $region23: #{tpu_custom_call.1} parent=11 // pred_region
          _
        $region24: #{tpu_custom_call.1} parent=11 // pred_fallthru
          _
        // Predicated region
        $region25: #{tpu_custom_call.1} parent=11 // pred_check
          %p229 = pneg %p133
        $region26: #{tpu_custom_call.1} parent=11 // pred_check_branch
          %231 = sbr.rel (%p229) target = $region28
        $region27: #{tpu_custom_call.1} parent=11 // pred_region
          _
        $region28: #{tpu_custom_call.1} parent=11 // pred_fallthru
          _
      $region12: #{tpu_custom_call.1} parent=5 // pred_fallthru
        _
      %p232 = scmp.lt.s32.totalorder %s23, 2
      // Predicated region
      $region29: #{tpu_custom_call.1} parent=5 // pred_check
        %p233 = pneg %p232
      $region30: #{tpu_custom_call.1} parent=5 // pred_check_branch
        %235 = sbr.rel (%p233) target = $region32
      $region31: #{tpu_custom_call.1} parent=5 // pred_region
        // Predicated region
        $region33: #{tpu_custom_call.1} parent=31 // pred_check
          %p236 = pneg %p43
        $region34: #{tpu_custom_call.1} parent=31 // pred_check_branch
          %238 = sbr.rel (%p236) target = $region36
        $region35: #{tpu_custom_call.1} parent=31 // pred_region
          %s239 = sand.u32 %s33, 1
          %s240 = scalar_lea.sflag [#allocation4], %s239
          %s241 = sand.u32 %s33, 1
          %s242 = smul.addr %s241, 8
          %s243 = scalar_lea.vmem [#allocation3], %s242
          %s245 = ssub.s32 128, 128
          %246 = vsyncadd %s240, %s245
          %s247 = smul.addr %s23, 128
          %s248 = scalar_lea.hbm %s0, %s247
          %s250 = sshll.u32 %s243, 4
          %s251 = int_to_ptr.vmem [resolvable:$true] %s250
          %253 = dma.hbm_to_vmem [thread:$0]  %s248, 128, %s251, %s240
        $region36: #{tpu_custom_call.1} parent=31 // pred_fallthru
          _
      $region32: #{tpu_custom_call.1} parent=5 // pred_fallthru
        _
      %p254 = scmp.le.s32.totalorder 1, %s23
      %p255 = scmp.lt.s32.totalorder %s23, 3
      %p256 = pnand %p254, %p255
      %p257 = pneg %p256
      // Predicated region
      $region37: #{tpu_custom_call.1} parent=5 // pred_check
        _
      $region38: #{tpu_custom_call.1} parent=5 // pred_check_branch
        %259 = sbr.rel (%p256) target = $region40
      $region39: #{tpu_custom_call.1} parent=5 // pred_region
        %s260 = ssub.s32 %s23, 1
        %s261 = sand.u32 %s36, 1
        %s262 = scalar_lea.sflag [#allocation4], %s261
        %s263 = sand.u32 %s36, 1
        %s264 = smul.addr %s263, 8
        %s265 = scalar_lea.vmem [#allocation3], %s264
        // Predicated region
        $region41: #{tpu_custom_call.1} parent=39 // pred_check
          %p266 = pneg %p49
        $region42: #{tpu_custom_call.1} parent=39 // pred_check_branch
          %268 = sbr.rel (%p266) target = $region44
        $region43: #{tpu_custom_call.1} parent=39 // pred_region
          %269 = dma.done %s262, 128
        $region44: #{tpu_custom_call.1} parent=39 // pred_fallthru
          _
        // Predicated region
        $region45: #{tpu_custom_call.1} parent=39 // pred_check
          %p270 = pneg %p70
        $region46: #{tpu_custom_call.1} parent=39 // pred_check_branch
          %272 = sbr.rel (%p270) target = $region48
        $region47: #{tpu_custom_call.1} parent=39 // pred_region
          %273 = dma.done [#allocation7], 512
        $region48: #{tpu_custom_call.1} parent=39 // pred_fallthru
          _
        // Predicated region
        $region49: #{tpu_custom_call.1} parent=39 // pred_check
          %p274 = pneg %p91
        $region50: #{tpu_custom_call.1} parent=39 // pred_check_branch
          %276 = sbr.rel (%p274) target = $region52
        $region51: #{tpu_custom_call.1} parent=39 // pred_region
          %277 = dma.done [#allocation7], 512
        $region52: #{tpu_custom_call.1} parent=39 // pred_fallthru
          _
        %s278 = sand.u32 %s36, 1
        %s279 = scalar_lea.sflag [#allocation4], %s278
        %s280 = sand.u32 %s36, 1
        %s281 = smul.addr %s280, 8
        %s282 = scalar_lea.vmem [#allocation3], %s281
        %p283 = pneg %p49
        %p284 = pneg %p46
        %p285 = pneg %p70
        %p286 = pneg %p67
        %p287 = pneg %p91
        %p288 = pneg %p88
        %p289 = pneg %p112
        %p290 = pneg %p109
        %p291 = pneg %p133
        %p292 = pneg %p130
        %p293 = pneg %p159
        %p294 = pneg %p156
        %s295 = sand.u32 %s146, 1
        %s296 = scalar_lea.sflag [#allocation5], %s295
        %s297 = sand.u32 %s146, 1
        %s298 = smul.addr %s297, 8
        %s299 = scalar_lea.vmem [#allocation9], %s298
        %p300 = pneg %p185
        %p301 = pneg %p182
        %s302 = sand.u32 %s172, 1
        %s303 = scalar_lea.sflag [#allocation11], %s302
        %s304 = sand.u32 %s172, 1
        %s305 = smul.addr %s304, 32
        %s306 = scalar_lea.vmem [#allocation10], %s305
        %v307 = vld [vmem:[%s265] sm:$0xff]
        %v308 = vld [vmem:[#allocation6] sm:$0xff]
        %v309 = vld [vmem:[#allocation6 + $0x8] sm:$0xff]
        %v310 = vld [vmem:[#allocation6 + $0x10] sm:$0xff]
        %v311 = vld [vmem:[#allocation6 + $0x18] sm:$0xff]
        %v312 = vld [vmem:[#allocation8] sm:$0xff]
        %v313 = vld [vmem:[#allocation8 + $0x8] sm:$0xff]
        %v314 = vld [vmem:[#allocation8 + $0x10] sm:$0xff]
        %v315 = vld [vmem:[#allocation8 + $0x18] sm:$0xff]
        %v316 = vld [vmem:[%s3] sm:$0xff]
        %vm317 = vcmask 261120
        %v319 = vsel %vm317, %v307, 0
        %321 = vmatprep.subr.mxu0 0.0
        %322 = vmatpush1.msra.mxu0 %v308
        %323 = vmatprep.subr.mxu0 0.0
        %324 = vmatpush1.msra.mxu0 %v309
        %325 = vmatprep.subr.mxu0 0.0
        %326 = vmatpush1.msra.mxu0 %v310
        %327 = vmatprep.subr.mxu0 0.0
        %328 = vmatpush1.msra.mxu0 %v311
        %329 = vmatprep.subr.mxu0 0.0
        %330 = vmatpush1.msra.mxu0 0.0
        %331 = vmatprep.subr.mxu0 0.0
        %332 = vmatpush1.msra.mxu0 0.0
        %333 = vmatprep.subr.mxu0 0.0
        %334 = vmatpush1.msra.mxu0 0.0
        %335 = vmatprep.subr.mxu0 0.0
        %336 = vmatpush1.msra.mxu0 0.0
        %337 = vmatprep.subr.mxu0 0.0
        %338 = vmatpush1.msra.mxu0 0.0
        %339 = vmatprep.subr.mxu0 0.0
        %340 = vmatpush1.msra.mxu0 0.0
        %341 = vmatprep.subr.mxu0 0.0
        %342 = vmatpush1.msra.mxu0 0.0
        %343 = vmatprep.subr.mxu0 0.0
        %344 = vmatpush1.msra.mxu0 0.0
        %345 = vmatprep.subr.mxu0 0.0
        %346 = vmatpush1.msra.mxu0 0.0
        %347 = vmatprep.subr.mxu0 0.0
        %348 = vmatpush1.msra.mxu0 0.0
        %349 = vmatprep.subr.mxu0 0.0
        %350 = vmatpush1.msra.mxu0 0.0
        %351 = vmatprep.subr.mxu0 0.0
        %352 = vmatpush1.msra.mxu0 0.0
        %353 = vmatprep.subr.mxu0 0.0
        %354 = vmatpush1.msra.mxu0 0.0
        %355 = vmatprep.subr.mxu0 0.0
        %356 = vmatpush1.msra.mxu0 0.0
        %357 = vmatprep.subr.mxu0 0.0
        %358 = vmatpush1.msra.mxu0 0.0
        %359 = vmatprep.subr.mxu0 0.0
        %360 = vmatpush1.msra.mxu0 0.0
        %361 = vmatprep.subr.mxu0 0.0
        %362 = vmatpush1.msra.mxu0 0.0
        %363 = vmatprep.subr.mxu0 0.0
        %364 = vmatpush1.msra.mxu0 0.0
        %365 = vmatprep.subr.mxu0 0.0
        %366 = vmatpush1.msra.mxu0 0.0
        %367 = vmatprep.subr.mxu0 0.0
        %368 = vmatpush1.msra.mxu0 0.0
        %369 = vmatprep.subr.mxu0 0.0
        %370 = vmatpush1.msra.mxu0 0.0
        %371 = vmatprep.subr.mxu0 0.0
        %372 = vmatpush1.msra.mxu0 0.0
        %373 = vmatprep.subr.mxu0 0.0
        %374 = vmatpush1.msra.mxu0 0.0
        %375 = vmatprep.subr.mxu0 0.0
        %376 = vmatpush1.msra.mxu0 0.0
        %377 = vmatprep.subr.mxu0 0.0
        %378 = vmatpush1.msra.mxu0 0.0
        %379 = vmatprep.subr.mxu0 0.0
        %380 = vmatpush1.msra.mxu0 0.0
        %381 = vmatprep.subr.mxu0 0.0
        %382 = vmatpush1.msra.mxu0 0.0
        %383 = vmatprep.subr.mxu0 0.0
        %384 = vmatpush1.msra.mxu0 0.0
        %385 = vmatprep.mubr.f32.mxu0 0.0
        %386 = vmatmul.mubr.f32.gmra.mrb[0].mxu0 %v319
        %v387 = vpop.f32.mrb[0].mxu0
        %v388 = vadd.f32 0.0, %v387
        %v389 = vpop.f32.mrb[0].mxu0
        %390 = vdwg.mxu0
        %v391 = vmul.f32 %v388, 0.17677669
        %393 = vrot.lane.b32.xlu0 %v388, 96
        %v394 = vpop.permute.xlu0 %393
        %vm395 = vcmask 64512
        %v397 = vsel %vm395, %v391, 0
        %v399 = vsel %vm395, %v394, 0
        %401 = vmatprep.subr.mxu0 0.0
        %402 = vmatpush1.xpose.msra.mxu0 %v399
        %403 = vmatprep.subr.mxu0 0.0
        %404 = vmatpush1.xpose.msra.mxu0 0.0
        %405 = vmatprep.subr.mxu0 0.0
        %406 = vmatpush1.xpose.msra.mxu0 0.0
        %407 = vmatprep.subr.mxu0 0.0
        %408 = vmatpush1.xpose.msra.mxu0 0.0
        %409 = vmatprep.subr.mxu0 0.0
        %410 = vmatpush1.xpose.msra.mxu0 0.0
        %411 = vmatprep.subr.mxu0 0.0
        %412 = vmatpush1.xpose.msra.mxu0 0.0
        %413 = vmatprep.subr.mxu0 0.0
        %414 = vmatpush1.xpose.msra.mxu0 0.0
        %415 = vmatprep.subr.mxu0 0.0
        %416 = vmatpush1.xpose.msra.mxu0 0.0
        %417 = vmatprep.subr.mxu0 0.0
        %418 = vmatpush1.xpose.msra.mxu0 0.0
        %419 = vmatprep.subr.mxu0 0.0
        %420 = vmatpush1.xpose.msra.mxu0 0.0
        %421 = vmatprep.subr.mxu0 0.0
        %422 = vmatpush1.xpose.msra.mxu0 0.0
        %423 = vmatprep.subr.mxu0 0.0
        %424 = vmatpush1.xpose.msra.mxu0 0.0
        %425 = vmatprep.subr.mxu0 0.0
        %426 = vmatpush1.xpose.msra.mxu0 0.0
        %427 = vmatprep.subr.mxu0 0.0
        %428 = vmatpush1.xpose.msra.mxu0 0.0
        %429 = vmatprep.subr.mxu0 0.0
        %430 = vmatpush1.xpose.msra.mxu0 0.0
        %431 = vmatprep.subr.mxu0 0.0
        %432 = vmatpush1.xpose.msra.mxu0 0.0
        %433 = vmatprep.subr.mxu0 0.0
        %434 = vmatpush1.xpose.msra.mxu0 0.0
        %435 = vmatprep.subr.mxu0 0.0
        %436 = vmatpush1.xpose.msra.mxu0 0.0
        %437 = vmatprep.subr.mxu0 0.0
        %438 = vmatpush1.xpose.msra.mxu0 0.0
        %439 = vmatprep.subr.mxu0 0.0
        %440 = vmatpush1.xpose.msra.mxu0 0.0
        %441 = vmatprep.subr.mxu0 0.0
        %442 = vmatpush1.xpose.msra.mxu0 0.0
        %443 = vmatprep.subr.mxu0 0.0
        %444 = vmatpush1.xpose.msra.mxu0 0.0
        %445 = vmatprep.subr.mxu0 0.0
        %446 = vmatpush1.xpose.msra.mxu0 0.0
        %447 = vmatprep.subr.mxu0 0.0
        %448 = vmatpush1.xpose.msra.mxu0 0.0
        %449 = vmatprep.subr.mxu0 0.0
        %450 = vmatpush1.xpose.msra.mxu0 0.0
        %451 = vmatprep.subr.mxu0 0.0
        %452 = vmatpush1.xpose.msra.mxu0 0.0
        %453 = vmatprep.subr.mxu0 0.0
        %454 = vmatpush1.xpose.msra.mxu0 0.0
        %455 = vmatprep.subr.mxu0 0.0
        %456 = vmatpush1.xpose.msra.mxu0 0.0
        %457 = vmatprep.subr.mxu0 0.0
        %458 = vmatpush1.xpose.msra.mxu0 0.0
        %459 = vmatprep.subr.mxu0 0.0
        %460 = vmatpush1.xpose.msra.mxu0 0.0
        %461 = vmatprep.subr.mxu0 0.0
        %462 = vmatpush1.xpose.msra.mxu0 0.0
        %463 = vmatprep.subr.mxu0 0.0
        %464 = vmatpush1.xpose.msra.mxu0 0.0
        %465 = vmatprep.mubr.f32.mxu0 0.0
        %466 = vmatmul.mubr.f32.gmra.mrb[0].mxu0 %v397
        %v467 = vpop.f32.mrb[0].mxu0
        %v468 = vadd.f32 %v316, %v467
        %v469 = vpop.f32.mrb[0].mxu0
        %470 = vdwg.mxu0
        %v471 = vsel %vm395, %v468, -inf
        %472 = vmax.xlane.f32.xlu0 %v471
        %v473 = vpop.xlane.xlu0 %472
        %v474 = vsub.f32 %v468, %v473
        %v475 = vmul.f32 %v474, 1.442695
        %v476 = vpow.pop %v475
        %v477 = vsel %vm395, %v476, 0.0
        %478 = vadd.xlane.f32.xlu0 %v477
        %v479 = vpop.xlane.xlu0 %478
        %v480 = vrcp.pop %v479
        %v481 = vmul.f32 %v476, %v480
        %482 = vst.msk [vmem:[%s306] sm:$0xff] %vm395, %v481
        %483 = vrot.lane.b32.xlu0 %v388, 64
        %v484 = vpop.permute.xlu0 %483
        %v487 = vsel %vm395, %v481, 0
        %489 = vmatprep.subr.mxu0 0.0
        %490 = vmatpush1.msra.mxu0 %v484
        %491 = vmatprep.subr.mxu0 0.0
        %492 = vmatpush1.msra.mxu0 0.0
        %493 = vmatprep.subr.mxu0 0.0
        %494 = vmatpush1.msra.mxu0 0.0
        %495 = vmatprep.subr.mxu0 0.0
        %496 = vmatpush1.msra.mxu0 0.0
        %497 = vmatprep.subr.mxu0 0.0
        %498 = vmatpush1.msra.mxu0 0.0
        %499 = vmatprep.subr.mxu0 0.0
        %500 = vmatpush1.msra.mxu0 0.0
        %501 = vmatprep.subr.mxu0 0.0
        %502 = vmatpush1.msra.mxu0 0.0
        %503 = vmatprep.subr.mxu0 0.0
        %504 = vmatpush1.msra.mxu0 0.0
        %505 = vmatprep.subr.mxu0 0.0
        %506 = vmatpush1.msra.mxu0 0.0
        %507 = vmatprep.subr.mxu0 0.0
        %508 = vmatpush1.msra.mxu0 0.0
        %509 = vmatprep.subr.mxu0 0.0
        %510 = vmatpush1.msra.mxu0 0.0
        %511 = vmatprep.subr.mxu0 0.0
        %512 = vmatpush1.msra.mxu0 0.0
        %513 = vmatprep.subr.mxu0 0.0
        %514 = vmatpush1.msra.mxu0 0.0
        %515 = vmatprep.subr.mxu0 0.0
        %516 = vmatpush1.msra.mxu0 0.0
        %517 = vmatprep.subr.mxu0 0.0
        %518 = vmatpush1.msra.mxu0 0.0
        %519 = vmatprep.subr.mxu0 0.0
        %520 = vmatpush1.msra.mxu0 0.0
        %521 = vmatprep.subr.mxu0 0.0
        %522 = vmatpush1.msra.mxu0 0.0
        %523 = vmatprep.subr.mxu0 0.0
        %524 = vmatpush1.msra.mxu0 0.0
        %525 = vmatprep.subr.mxu0 0.0
        %526 = vmatpush1.msra.mxu0 0.0
        %527 = vmatprep.subr.mxu0 0.0
        %528 = vmatpush1.msra.mxu0 0.0
        %529 = vmatprep.subr.mxu0 0.0
        %530 = vmatpush1.msra.mxu0 0.0
        %531 = vmatprep.subr.mxu0 0.0
        %532 = vmatpush1.msra.mxu0 0.0
        %533 = vmatprep.subr.mxu0 0.0
        %534 = vmatpush1.msra.mxu0 0.0
        %535 = vmatprep.subr.mxu0 0.0
        %536 = vmatpush1.msra.mxu0 0.0
        %537 = vmatprep.subr.mxu0 0.0
        %538 = vmatpush1.msra.mxu0 0.0
        %539 = vmatprep.subr.mxu0 0.0
        %540 = vmatpush1.msra.mxu0 0.0
        %541 = vmatprep.subr.mxu0 0.0
        %542 = vmatpush1.msra.mxu0 0.0
        %543 = vmatprep.subr.mxu0 0.0
        %544 = vmatpush1.msra.mxu0 0.0
        %545 = vmatprep.subr.mxu0 0.0
        %546 = vmatpush1.msra.mxu0 0.0
        %547 = vmatprep.subr.mxu0 0.0
        %548 = vmatpush1.msra.mxu0 0.0
        %549 = vmatprep.subr.mxu0 0.0
        %550 = vmatpush1.msra.mxu0 0.0
        %551 = vmatprep.subr.mxu0 0.0
        %552 = vmatpush1.msra.mxu0 0.0
        %553 = vmatprep.mubr.f32.mxu0 0.0
        %554 = vmatmul.mubr.f32.gmra.mrb[0].mxu0 %v487
        %v555 = vpop.f32.mrb[0].mxu0
        %v556 = vadd.f32 0.0, %v555
        %v557 = vpop.f32.mrb[0].mxu0
        %558 = vdwg.mxu0
        %559 = vst.msk [vmem:[#allocation2] sm:$0xff] %vm395, %v556
        %560 = vrot.lane.b32.xlu0 %v391, 120
        %v561 = vpop.permute.xlu0 %560
        %562 = vrot.lane.b32.xlu0 %v388, 88
        %v563 = vpop.permute.xlu0 %562
        %v564 = vsel %vm395, %v561, 0
        %v566 = vsel %vm395, %v563, 0
        %568 = vmatprep.subr.mxu0 0.0
        %569 = vmatpush1.xpose.msra.mxu0 %v566
        %570 = vmatprep.subr.mxu0 0.0
        %571 = vmatpush1.xpose.msra.mxu0 0.0
        %572 = vmatprep.subr.mxu0 0.0
        %573 = vmatpush1.xpose.msra.mxu0 0.0
        %574 = vmatprep.subr.mxu0 0.0
        %575 = vmatpush1.xpose.msra.mxu0 0.0
        %576 = vmatprep.subr.mxu0 0.0
        %577 = vmatpush1.xpose.msra.mxu0 0.0
        %578 = vmatprep.subr.mxu0 0.0
        %579 = vmatpush1.xpose.msra.mxu0 0.0
        %580 = vmatprep.subr.mxu0 0.0
        %581 = vmatpush1.xpose.msra.mxu0 0.0
        %582 = vmatprep.subr.mxu0 0.0
        %583 = vmatpush1.xpose.msra.mxu0 0.0
        %584 = vmatprep.subr.mxu0 0.0
        %585 = vmatpush1.xpose.msra.mxu0 0.0
        %586 = vmatprep.subr.mxu0 0.0
        %587 = vmatpush1.xpose.msra.mxu0 0.0
        %588 = vmatprep.subr.mxu0 0.0
        %589 = vmatpush1.xpose.msra.mxu0 0.0
        %590 = vmatprep.subr.mxu0 0.0
        %591 = vmatpush1.xpose.msra.mxu0 0.0
        %592 = vmatprep.subr.mxu0 0.0
        %593 = vmatpush1.xpose.msra.mxu0 0.0
        %594 = vmatprep.subr.mxu0 0.0
        %595 = vmatpush1.xpose.msra.mxu0 0.0
        %596 = vmatprep.subr.mxu0 0.0
        %597 = vmatpush1.xpose.msra.mxu0 0.0
        %598 = vmatprep.subr.mxu0 0.0
        %599 = vmatpush1.xpose.msra.mxu0 0.0
        %600 = vmatprep.subr.mxu0 0.0
        %601 = vmatpush1.xpose.msra.mxu0 0.0
        %602 = vmatprep.subr.mxu0 0.0
        %603 = vmatpush1.xpose.msra.mxu0 0.0
        %604 = vmatprep.subr.mxu0 0.0
        %605 = vmatpush1.xpose.msra.mxu0 0.0
        %606 = vmatprep.subr.mxu0 0.0
        %607 = vmatpush1.xpose.msra.mxu0 0.0
        %608 = vmatprep.subr.mxu0 0.0
        %609 = vmatpush1.xpose.msra.mxu0 0.0
        %610 = vmatprep.subr.mxu0 0.0
        %611 = vmatpush1.xpose.msra.mxu0 0.0
        %612 = vmatprep.subr.mxu0 0.0
        %613 = vmatpush1.xpose.msra.mxu0 0.0
        %614 = vmatprep.subr.mxu0 0.0
        %615 = vmatpush1.xpose.msra.mxu0 0.0
        %616 = vmatprep.subr.mxu0 0.0
        %617 = vmatpush1.xpose.msra.mxu0 0.0
        %618 = vmatprep.subr.mxu0 0.0
        %619 = vmatpush1.xpose.msra.mxu0 0.0
        %620 = vmatprep.subr.mxu0 0.0
        %621 = vmatpush1.xpose.msra.mxu0 0.0
        %622 = vmatprep.subr.mxu0 0.0
        %623 = vmatpush1.xpose.msra.mxu0 0.0
        %624 = vmatprep.subr.mxu0 0.0
        %625 = vmatpush1.xpose.msra.mxu0 0.0
        %626 = vmatprep.subr.mxu0 0.0
        %627 = vmatpush1.xpose.msra.mxu0 0.0
        %628 = vmatprep.subr.mxu0 0.0
        %629 = vmatpush1.xpose.msra.mxu0 0.0
        %630 = vmatprep.subr.mxu0 0.0
        %631 = vmatpush1.xpose.msra.mxu0 0.0
        %632 = vmatprep.mubr.f32.mxu0 0.0
        %633 = vmatmul.mubr.f32.gmra.mrb[0].mxu0 %v564
        %v634 = vpop.f32.mrb[0].mxu0
        %v635 = vadd.f32 %v316, %v634
        %v636 = vpop.f32.mrb[0].mxu0
        %637 = vdwg.mxu0
        %v638 = vsel %vm395, %v635, -inf
        %639 = vmax.xlane.f32.xlu0 %v638
        %v640 = vpop.xlane.xlu0 %639
        %v641 = vsub.f32 %v635, %v640
        %v642 = vmul.f32 %v641, 1.442695
        %v643 = vpow.pop %v642
        %v644 = vsel %vm395, %v643, 0.0
        %645 = vadd.xlane.f32.xlu0 %v644
        %v646 = vpop.xlane.xlu0 %645
        %v647 = vrcp.pop %v646
        %v648 = vmul.f32 %v643, %v647
        %s649 = scalar_lea.vmem %s306, 8 [#allocation10]
        %650 = vst.msk [vmem:[%s649] sm:$0xff] %vm395, %v648
        %651 = vrot.lane.b32.xlu0 %v388, 56
        %v652 = vpop.permute.xlu0 %651
        %v655 = vsel %vm395, %v648, 0
        %657 = vmatprep.subr.mxu0 0.0
        %658 = vmatpush1.msra.mxu0 %v652
        %659 = vmatprep.subr.mxu0 0.0
        %660 = vmatpush1.msra.mxu0 0.0
        %661 = vmatprep.subr.mxu0 0.0
        %662 = vmatpush1.msra.mxu0 0.0
        %663 = vmatprep.subr.mxu0 0.0
        %664 = vmatpush1.msra.mxu0 0.0
        %665 = vmatprep.subr.mxu0 0.0
        %666 = vmatpush1.msra.mxu0 0.0
        %667 = vmatprep.subr.mxu0 0.0
        %668 = vmatpush1.msra.mxu0 0.0
        %669 = vmatprep.subr.mxu0 0.0
        %670 = vmatpush1.msra.mxu0 0.0
        %671 = vmatprep.subr.mxu0 0.0
        %672 = vmatpush1.msra.mxu0 0.0
        %673 = vmatprep.subr.mxu0 0.0
        %674 = vmatpush1.msra.mxu0 0.0
        %675 = vmatprep.subr.mxu0 0.0
        %676 = vmatpush1.msra.mxu0 0.0
        %677 = vmatprep.subr.mxu0 0.0
        %678 = vmatpush1.msra.mxu0 0.0
        %679 = vmatprep.subr.mxu0 0.0
        %680 = vmatpush1.msra.mxu0 0.0
        %681 = vmatprep.subr.mxu0 0.0
        %682 = vmatpush1.msra.mxu0 0.0
        %683 = vmatprep.subr.mxu0 0.0
        %684 = vmatpush1.msra.mxu0 0.0
        %685 = vmatprep.subr.mxu0 0.0
        %686 = vmatpush1.msra.mxu0 0.0
        %687 = vmatprep.subr.mxu0 0.0
        %688 = vmatpush1.msra.mxu0 0.0
        %689 = vmatprep.subr.mxu0 0.0
        %690 = vmatpush1.msra.mxu0 0.0
        %691 = vmatprep.subr.mxu0 0.0
        %692 = vmatpush1.msra.mxu0 0.0
        %693 = vmatprep.subr.mxu0 0.0
        %694 = vmatpush1.msra.mxu0 0.0
        %695 = vmatprep.subr.mxu0 0.0
        %696 = vmatpush1.msra.mxu0 0.0
        %697 = vmatprep.subr.mxu0 0.0
        %698 = vmatpush1.msra.mxu0 0.0
        %699 = vmatprep.subr.mxu0 0.0
        %700 = vmatpush1.msra.mxu0 0.0
        %701 = vmatprep.subr.mxu0 0.0
        %702 = vmatpush1.msra.mxu0 0.0
        %703 = vmatprep.subr.mxu0 0.0
        %704 = vmatpush1.msra.mxu0 0.0
        %705 = vmatprep.subr.mxu0 0.0
        %706 = vmatpush1.msra.mxu0 0.0
        %707 = vmatprep.subr.mxu0 0.0
        %708 = vmatpush1.msra.mxu0 0.0
        %709 = vmatprep.subr.mxu0 0.0
        %710 = vmatpush1.msra.mxu0 0.0
        %711 = vmatprep.subr.mxu0 0.0
        %712 = vmatpush1.msra.mxu0 0.0
        %713 = vmatprep.subr.mxu0 0.0
        %714 = vmatpush1.msra.mxu0 0.0
        %715 = vmatprep.subr.mxu0 0.0
        %716 = vmatpush1.msra.mxu0 0.0
        %717 = vmatprep.subr.mxu0 0.0
        %718 = vmatpush1.msra.mxu0 0.0
        %719 = vmatprep.subr.mxu0 0.0
        %720 = vmatpush1.msra.mxu0 0.0
        %721 = vmatprep.mubr.f32.mxu0 0.0
        %722 = vmatmul.mubr.f32.gmra.mrb[0].mxu0 %v655
        %v723 = vpop.f32.mrb[0].mxu0
        %v724 = vadd.f32 0.0, %v723
        %v725 = vpop.f32.mrb[0].mxu0
        %726 = vdwg.mxu0
        %728 = vrot.lane.b32.xlu0 %v724, 8
        %v729 = vpop.permute.xlu0 %728
        %vm731 = vcmask 130112
        %732 = vst.msk [vmem:[#allocation2] sm:$0xff] %vm731, %v729
        %733 = vrot.lane.b32.xlu0 %v391, 112
        %v734 = vpop.permute.xlu0 %733
        %735 = vrot.lane.b32.xlu0 %v388, 80
        %v736 = vpop.permute.xlu0 %735
        %v737 = vsel %vm395, %v734, 0
        %v739 = vsel %vm395, %v736, 0
        %741 = vmatprep.subr.mxu0 0.0
        %742 = vmatpush1.xpose.msra.mxu0 %v739
        %743 = vmatprep.subr.mxu0 0.0
        %744 = vmatpush1.xpose.msra.mxu0 0.0
        %745 = vmatprep.subr.mxu0 0.0
        %746 = vmatpush1.xpose.msra.mxu0 0.0
        %747 = vmatprep.subr.mxu0 0.0
        %748 = vmatpush1.xpose.msra.mxu0 0.0
        %749 = vmatprep.subr.mxu0 0.0
        %750 = vmatpush1.xpose.msra.mxu0 0.0
        %751 = vmatprep.subr.mxu0 0.0
        %752 = vmatpush1.xpose.msra.mxu0 0.0
        %753 = vmatprep.subr.mxu0 0.0
        %754 = vmatpush1.xpose.msra.mxu0 0.0
        %755 = vmatprep.subr.mxu0 0.0
        %756 = vmatpush1.xpose.msra.mxu0 0.0
        %757 = vmatprep.subr.mxu0 0.0
        %758 = vmatpush1.xpose.msra.mxu0 0.0
        %759 = vmatprep.subr.mxu0 0.0
        %760 = vmatpush1.xpose.msra.mxu0 0.0
        %761 = vmatprep.subr.mxu0 0.0
        %762 = vmatpush1.xpose.msra.mxu0 0.0
        %763 = vmatprep.subr.mxu0 0.0
        %764 = vmatpush1.xpose.msra.mxu0 0.0
        %765 = vmatprep.subr.mxu0 0.0
        %766 = vmatpush1.xpose.msra.mxu0 0.0
        %767 = vmatprep.subr.mxu0 0.0
        %768 = vmatpush1.xpose.msra.mxu0 0.0
        %769 = vmatprep.subr.mxu0 0.0
        %770 = vmatpush1.xpose.msra.mxu0 0.0
        %771 = vmatprep.subr.mxu0 0.0
        %772 = vmatpush1.xpose.msra.mxu0 0.0
        %773 = vmatprep.subr.mxu0 0.0
        %774 = vmatpush1.xpose.msra.mxu0 0.0
        %775 = vmatprep.subr.mxu0 0.0
        %776 = vmatpush1.xpose.msra.mxu0 0.0
        %777 = vmatprep.subr.mxu0 0.0
        %778 = vmatpush1.xpose.msra.mxu0 0.0
        %779 = vmatprep.subr.mxu0 0.0
        %780 = vmatpush1.xpose.msra.mxu0 0.0
        %781 = vmatprep.subr.mxu0 0.0
        %782 = vmatpush1.xpose.msra.mxu0 0.0
        %783 = vmatprep.subr.mxu0 0.0
        %784 = vmatpush1.xpose.msra.mxu0 0.0
        %785 = vmatprep.subr.mxu0 0.0
        %786 = vmatpush1.xpose.msra.mxu0 0.0
        %787 = vmatprep.subr.mxu0 0.0
        %788 = vmatpush1.xpose.msra.mxu0 0.0
        %789 = vmatprep.subr.mxu0 0.0
        %790 = vmatpush1.xpose.msra.mxu0 0.0
        %791 = vmatprep.subr.mxu0 0.0
        %792 = vmatpush1.xpose.msra.mxu0 0.0
        %793 = vmatprep.subr.mxu0 0.0
        %794 = vmatpush1.xpose.msra.mxu0 0.0
        %795 = vmatprep.subr.mxu0 0.0
        %796 = vmatpush1.xpose.msra.mxu0 0.0
        %797 = vmatprep.subr.mxu0 0.0
        %798 = vmatpush1.xpose.msra.mxu0 0.0
        %799 = vmatprep.subr.mxu0 0.0
        %800 = vmatpush1.xpose.msra.mxu0 0.0
        %801 = vmatprep.subr.mxu0 0.0
        %802 = vmatpush1.xpose.msra.mxu0 0.0
        %803 = vmatprep.subr.mxu0 0.0
        %804 = vmatpush1.xpose.msra.mxu0 0.0
        %805 = vmatprep.mubr.f32.mxu0 0.0
        %806 = vmatmul.mubr.f32.gmra.mrb[0].mxu0 %v737
        %v807 = vpop.f32.mrb[0].mxu0
        %v808 = vadd.f32 %v316, %v807
        %v809 = vpop.f32.mrb[0].mxu0
        %810 = vdwg.mxu0
        %v811 = vsel %vm395, %v808, -inf
        %812 = vmax.xlane.f32.xlu0 %v811
        %v813 = vpop.xlane.xlu0 %812
        %v814 = vsub.f32 %v808, %v813
        %v815 = vmul.f32 %v814, 1.442695
        %v816 = vpow.pop %v815
        %v817 = vsel %vm395, %v816, 0.0
        %818 = vadd.xlane.f32.xlu0 %v817
        %v819 = vpop.xlane.xlu0 %818
        %v820 = vrcp.pop %v819
        %v821 = vmul.f32 %v816, %v820
        %s822 = scalar_lea.vmem %s306, 16 [#allocation10]
        %823 = vst.msk [vmem:[%s822] sm:$0xff] %vm395, %v821
        %824 = vrot.lane.b32.xlu0 %v388, 48
        %v825 = vpop.permute.xlu0 %824
        %v828 = vsel %vm395, %v821, 0
        %830 = vmatprep.subr.mxu0 0.0
        %831 = vmatpush1.msra.mxu0 %v825
        %832 = vmatprep.subr.mxu0 0.0
        %833 = vmatpush1.msra.mxu0 0.0
        %834 = vmatprep.subr.mxu0 0.0
        %835 = vmatpush1.msra.mxu0 0.0
        %836 = vmatprep.subr.mxu0 0.0
        %837 = vmatpush1.msra.mxu0 0.0
        %838 = vmatprep.subr.mxu0 0.0
        %839 = vmatpush1.msra.mxu0 0.0
        %840 = vmatprep.subr.mxu0 0.0
        %841 = vmatpush1.msra.mxu0 0.0
        %842 = vmatprep.subr.mxu0 0.0
        %843 = vmatpush1.msra.mxu0 0.0
        %844 = vmatprep.subr.mxu0 0.0
        %845 = vmatpush1.msra.mxu0 0.0
        %846 = vmatprep.subr.mxu0 0.0
        %847 = vmatpush1.msra.mxu0 0.0
        %848 = vmatprep.subr.mxu0 0.0
        %849 = vmatpush1.msra.mxu0 0.0
        %850 = vmatprep.subr.mxu0 0.0
        %851 = vmatpush1.msra.mxu0 0.0
        %852 = vmatprep.subr.mxu0 0.0
        %853 = vmatpush1.msra.mxu0 0.0
        %854 = vmatprep.subr.mxu0 0.0
        %855 = vmatpush1.msra.mxu0 0.0
        %856 = vmatprep.subr.mxu0 0.0
        %857 = vmatpush1.msra.mxu0 0.0
        %858 = vmatprep.subr.mxu0 0.0
        %859 = vmatpush1.msra.mxu0 0.0
        %860 = vmatprep.subr.mxu0 0.0
        %861 = vmatpush1.msra.mxu0 0.0
        %862 = vmatprep.subr.mxu0 0.0
        %863 = vmatpush1.msra.mxu0 0.0
        %864 = vmatprep.subr.mxu0 0.0
        %865 = vmatpush1.msra.mxu0 0.0
        %866 = vmatprep.subr.mxu0 0.0
        %867 = vmatpush1.msra.mxu0 0.0
        %868 = vmatprep.subr.mxu0 0.0
        %869 = vmatpush1.msra.mxu0 0.0
        %870 = vmatprep.subr.mxu0 0.0
        %871 = vmatpush1.msra.mxu0 0.0
        %872 = vmatprep.subr.mxu0 0.0
        %873 = vmatpush1.msra.mxu0 0.0
        %874 = vmatprep.subr.mxu0 0.0
        %875 = vmatpush1.msra.mxu0 0.0
        %876 = vmatprep.subr.mxu0 0.0
        %877 = vmatpush1.msra.mxu0 0.0
        %878 = vmatprep.subr.mxu0 0.0
        %879 = vmatpush1.msra.mxu0 0.0
        %880 = vmatprep.subr.mxu0 0.0
        %881 = vmatpush1.msra.mxu0 0.0
        %882 = vmatprep.subr.mxu0 0.0
        %883 = vmatpush1.msra.mxu0 0.0
        %884 = vmatprep.subr.mxu0 0.0
        %885 = vmatpush1.msra.mxu0 0.0
        %886 = vmatprep.subr.mxu0 0.0
        %887 = vmatpush1.msra.mxu0 0.0
        %888 = vmatprep.subr.mxu0 0.0
        %889 = vmatpush1.msra.mxu0 0.0
        %890 = vmatprep.subr.mxu0 0.0
        %891 = vmatpush1.msra.mxu0 0.0
        %892 = vmatprep.subr.mxu0 0.0
        %893 = vmatpush1.msra.mxu0 0.0
        %894 = vmatprep.mubr.f32.mxu0 0.0
        %895 = vmatmul.mubr.f32.gmra.mrb[0].mxu0 %v828
        %v896 = vpop.f32.mrb[0].mxu0
        %v897 = vadd.f32 0.0, %v896
        %v898 = vpop.f32.mrb[0].mxu0
        %899 = vdwg.mxu0
        %901 = vrot.lane.b32.xlu0 %v897, 16
        %v902 = vpop.permute.xlu0 %901
        %vm904 = vcmask 195712
        %905 = vst.msk [vmem:[#allocation2] sm:$0xff] %vm904, %v902
        %906 = vrot.lane.b32.xlu0 %v391, 104
        %v907 = vpop.permute.xlu0 %906
        %908 = vrot.lane.b32.xlu0 %v388, 72
        %v909 = vpop.permute.xlu0 %908
        %v910 = vsel %vm395, %v907, 0
        %v912 = vsel %vm395, %v909, 0
        %914 = vmatprep.subr.mxu0 0.0
        %915 = vmatpush1.xpose.msra.mxu0 %v912
        %916 = vmatprep.subr.mxu0 0.0
        %917 = vmatpush1.xpose.msra.mxu0 0.0
        %918 = vmatprep.subr.mxu0 0.0
        %919 = vmatpush1.xpose.msra.mxu0 0.0
        %920 = vmatprep.subr.mxu0 0.0
        %921 = vmatpush1.xpose.msra.mxu0 0.0
        %922 = vmatprep.subr.mxu0 0.0
        %923 = vmatpush1.xpose.msra.mxu0 0.0
        %924 = vmatprep.subr.mxu0 0.0
        %925 = vmatpush1.xpose.msra.mxu0 0.0
        %926 = vmatprep.subr.mxu0 0.0
        %927 = vmatpush1.xpose.msra.mxu0 0.0
        %928 = vmatprep.subr.mxu0 0.0
        %929 = vmatpush1.xpose.msra.mxu0 0.0
        %930 = vmatprep.subr.mxu0 0.0
        %931 = vmatpush1.xpose.msra.mxu0 0.0
        %932 = vmatprep.subr.mxu0 0.0
        %933 = vmatpush1.xpose.msra.mxu0 0.0
        %934 = vmatprep.subr.mxu0 0.0
        %935 = vmatpush1.xpose.msra.mxu0 0.0
        %936 = vmatprep.subr.mxu0 0.0
        %937 = vmatpush1.xpose.msra.mxu0 0.0
        %938 = vmatprep.subr.mxu0 0.0
        %939 = vmatpush1.xpose.msra.mxu0 0.0
        %940 = vmatprep.subr.mxu0 0.0
        %941 = vmatpush1.xpose.msra.mxu0 0.0
        %942 = vmatprep.subr.mxu0 0.0
        %943 = vmatpush1.xpose.msra.mxu0 0.0
        %944 = vmatprep.subr.mxu0 0.0
        %945 = vmatpush1.xpose.msra.mxu0 0.0
        %946 = vmatprep.subr.mxu0 0.0
        %947 = vmatpush1.xpose.msra.mxu0 0.0
        %948 = vmatprep.subr.mxu0 0.0
        %949 = vmatpush1.xpose.msra.mxu0 0.0
        %950 = vmatprep.subr.mxu0 0.0
        %951 = vmatpush1.xpose.msra.mxu0 0.0
        %952 = vmatprep.subr.mxu0 0.0
        %953 = vmatpush1.xpose.msra.mxu0 0.0
        %954 = vmatprep.subr.mxu0 0.0
        %955 = vmatpush1.xpose.msra.mxu0 0.0
        %956 = vmatprep.subr.mxu0 0.0
        %957 = vmatpush1.xpose.msra.mxu0 0.0
        %958 = vmatprep.subr.mxu0 0.0
        %959 = vmatpush1.xpose.msra.mxu0 0.0
        %960 = vmatprep.subr.mxu0 0.0
        %961 = vmatpush1.xpose.msra.mxu0 0.0
        %962 = vmatprep.subr.mxu0 0.0
        %963 = vmatpush1.xpose.msra.mxu0 0.0
        %964 = vmatprep.subr.mxu0 0.0
        %965 = vmatpush1.xpose.msra.mxu0 0.0
        %966 = vmatprep.subr.mxu0 0.0
        %967 = vmatpush1.xpose.msra.mxu0 0.0
        %968 = vmatprep.subr.mxu0 0.0
        %969 = vmatpush1.xpose.msra.mxu0 0.0
        %970 = vmatprep.subr.mxu0 0.0
        %971 = vmatpush1.xpose.msra.mxu0 0.0
        %972 = vmatprep.subr.mxu0 0.0
        %973 = vmatpush1.xpose.msra.mxu0 0.0
        %974 = vmatprep.subr.mxu0 0.0
        %975 = vmatpush1.xpose.msra.mxu0 0.0
        %976 = vmatprep.subr.mxu0 0.0
        %977 = vmatpush1.xpose.msra.mxu0 0.0
        %978 = vmatprep.mubr.f32.mxu0 0.0
        %979 = vmatmul.mubr.f32.gmra.mrb[0].mxu0 %v910
        %v980 = vpop.f32.mrb[0].mxu0
        %v981 = vadd.f32 %v316, %v980
        %v982 = vpop.f32.mrb[0].mxu0
        %983 = vdwg.mxu0
        %v984 = vsel %vm395, %v981, -inf
        %985 = vmax.xlane.f32.xlu0 %v984
        %v986 = vpop.xlane.xlu0 %985
        %v987 = vsub.f32 %v981, %v986
        %v988 = vmul.f32 %v987, 1.442695
        %v989 = vpow.pop %v988
        %v990 = vsel %vm395, %v989, 0.0
        %991 = vadd.xlane.f32.xlu0 %v990
        %v992 = vpop.xlane.xlu0 %991
        %v993 = vrcp.pop %v992
        %v994 = vmul.f32 %v989, %v993
        %s995 = scalar_lea.vmem %s306, 24 [#allocation10]
        %996 = vst.msk [vmem:[%s995] sm:$0xff] %vm395, %v994
        %997 = vrot.lane.b32.xlu0 %v388, 40
        %v998 = vpop.permute.xlu0 %997
        %v1001 = vsel %vm395, %v994, 0
        %1003 = vmatprep.subr.mxu0 0.0
        %1004 = vmatpush1.msra.mxu0 %v998
        %1005 = vmatprep.subr.mxu0 0.0
        %1006 = vmatpush1.msra.mxu0 0.0
        %1007 = vmatprep.subr.mxu0 0.0
        %1008 = vmatpush1.msra.mxu0 0.0
        %1009 = vmatprep.subr.mxu0 0.0
        %1010 = vmatpush1.msra.mxu0 0.0
        %1011 = vmatprep.subr.mxu0 0.0
        %1012 = vmatpush1.msra.mxu0 0.0
        %1013 = vmatprep.subr.mxu0 0.0
        %1014 = vmatpush1.msra.mxu0 0.0
        %1015 = vmatprep.subr.mxu0 0.0
        %1016 = vmatpush1.msra.mxu0 0.0
        %1017 = vmatprep.subr.mxu0 0.0
        %1018 = vmatpush1.msra.mxu0 0.0
        %1019 = vmatprep.subr.mxu0 0.0
        %1020 = vmatpush1.msra.mxu0 0.0
        %1021 = vmatprep.subr.mxu0 0.0
        %1022 = vmatpush1.msra.mxu0 0.0
        %1023 = vmatprep.subr.mxu0 0.0
        %1024 = vmatpush1.msra.mxu0 0.0
        %1025 = vmatprep.subr.mxu0 0.0
        %1026 = vmatpush1.msra.mxu0 0.0
        %1027 = vmatprep.subr.mxu0 0.0
        %1028 = vmatpush1.msra.mxu0 0.0
        %1029 = vmatprep.subr.mxu0 0.0
        %1030 = vmatpush1.msra.mxu0 0.0
        %1031 = vmatprep.subr.mxu0 0.0
        %1032 = vmatpush1.msra.mxu0 0.0
        %1033 = vmatprep.subr.mxu0 0.0
        %1034 = vmatpush1.msra.mxu0 0.0
        %1035 = vmatprep.subr.mxu0 0.0
        %1036 = vmatpush1.msra.mxu0 0.0
        %1037 = vmatprep.subr.mxu0 0.0
        %1038 = vmatpush1.msra.mxu0 0.0
        %1039 = vmatprep.subr.mxu0 0.0
        %1040 = vmatpush1.msra.mxu0 0.0
        %1041 = vmatprep.subr.mxu0 0.0
        %1042 = vmatpush1.msra.mxu0 0.0
        %1043 = vmatprep.subr.mxu0 0.0
        %1044 = vmatpush1.msra.mxu0 0.0
        %1045 = vmatprep.subr.mxu0 0.0
        %1046 = vmatpush1.msra.mxu0 0.0
        %1047 = vmatprep.subr.mxu0 0.0
        %1048 = vmatpush1.msra.mxu0 0.0
        %1049 = vmatprep.subr.mxu0 0.0
        %1050 = vmatpush1.msra.mxu0 0.0
        %1051 = vmatprep.subr.mxu0 0.0
        %1052 = vmatpush1.msra.mxu0 0.0
        %1053 = vmatprep.subr.mxu0 0.0
        %1054 = vmatpush1.msra.mxu0 0.0
        %1055 = vmatprep.subr.mxu0 0.0
        %1056 = vmatpush1.msra.mxu0 0.0
        %1057 = vmatprep.subr.mxu0 0.0
        %1058 = vmatpush1.msra.mxu0 0.0
        %1059 = vmatprep.subr.mxu0 0.0
        %1060 = vmatpush1.msra.mxu0 0.0
        %1061 = vmatprep.subr.mxu0 0.0
        %1062 = vmatpush1.msra.mxu0 0.0
        %1063 = vmatprep.subr.mxu0 0.0
        %1064 = vmatpush1.msra.mxu0 0.0
        %1065 = vmatprep.subr.mxu0 0.0
        %1066 = vmatpush1.msra.mxu0 0.0
        %1067 = vmatprep.mubr.f32.mxu0 0.0
        %1068 = vmatmul.mubr.f32.gmra.mrb[0].mxu0 %v1001
        %v1069 = vpop.f32.mrb[0].mxu0
        %v1070 = vadd.f32 0.0, %v1069
        %v1071 = vpop.f32.mrb[0].mxu0
        %1072 = vdwg.mxu0
        %1074 = vrot.lane.b32.xlu0 %v1070, 24
        %v1075 = vpop.permute.xlu0 %1074
        %vm1077 = vcmask 261312
        %1078 = vst.msk [vmem:[#allocation2] sm:$0xff] %vm1077, %v1075
        %v1079 = vld [vmem:[#allocation2] sm:$0xff]
        %v1080 = vld [vmem:[%s4] sm:$0x1]
        %v1082 = vlaneseq
        %v1083 = vshrl.u32 %v1082, 7
        %v1084 = vsub.s32 0, %v1083
        %v1085 = vrot.slane %v1080, %v1084
        %v1088 = vsel %vm317, %v1079, 0
        %v1091 = vsel %vm317, %v312, 0
        %v1094 = vsel %vm317, %v313, 0
        %v1097 = vsel %vm317, %v314, 0
        %v1100 = vsel %vm317, %v315, 0
        %1102 = vmatprep.subr.mxu0 0.0
        %1103 = vmatpush1.xpose.msra.mxu0 %v1091
        %1104 = vmatprep.subr.mxu0 0.0
        %1105 = vmatpush1.xpose.msra.mxu0 %v1094
        %1106 = vmatprep.subr.mxu0 0.0
        %1107 = vmatpush1.xpose.msra.mxu0 %v1097
        %1108 = vmatprep.subr.mxu0 0.0
        %1109 = vmatpush1.xpose.msra.mxu0 %v1100
        %1110 = vmatprep.subr.mxu0 0.0
        %1111 = vmatpush1.xpose.msra.mxu0 0.0
        %1112 = vmatprep.subr.mxu0 0.0
        %1113 = vmatpush1.xpose.msra.mxu0 0.0
        %1114 = vmatprep.subr.mxu0 0.0
        %1115 = vmatpush1.xpose.msra.mxu0 0.0
        %1116 = vmatprep.subr.mxu0 0.0
        %1117 = vmatpush1.xpose.msra.mxu0 0.0
        %1118 = vmatprep.subr.mxu0 0.0
        %1119 = vmatpush1.xpose.msra.mxu0 0.0
        %1120 = vmatprep.subr.mxu0 0.0
        %1121 = vmatpush1.xpose.msra.mxu0 0.0
        %1122 = vmatprep.subr.mxu0 0.0
        %1123 = vmatpush1.xpose.msra.mxu0 0.0
        %1124 = vmatprep.subr.mxu0 0.0
        %1125 = vmatpush1.xpose.msra.mxu0 0.0
        %1126 = vmatprep.subr.mxu0 0.0
        %1127 = vmatpush1.xpose.msra.mxu0 0.0
        %1128 = vmatprep.subr.mxu0 0.0
        %1129 = vmatpush1.xpose.msra.mxu0 0.0
        %1130 = vmatprep.subr.mxu0 0.0
        %1131 = vmatpush1.xpose.msra.mxu0 0.0
        %1132 = vmatprep.subr.mxu0 0.0
        %1133 = vmatpush1.xpose.msra.mxu0 0.0
        %1134 = vmatprep.subr.mxu0 0.0
        %1135 = vmatpush1.xpose.msra.mxu0 0.0
        %1136 = vmatprep.subr.mxu0 0.0
        %1137 = vmatpush1.xpose.msra.mxu0 0.0
        %1138 = vmatprep.subr.mxu0 0.0
        %1139 = vmatpush1.xpose.msra.mxu0 0.0
        %1140 = vmatprep.subr.mxu0 0.0
        %1141 = vmatpush1.xpose.msra.mxu0 0.0
        %1142 = vmatprep.subr.mxu0 0.0
        %1143 = vmatpush1.xpose.msra.mxu0 0.0
        %1144 = vmatprep.subr.mxu0 0.0
        %1145 = vmatpush1.xpose.msra.mxu0 0.0
        %1146 = vmatprep.subr.mxu0 0.0
        %1147 = vmatpush1.xpose.msra.mxu0 0.0
        %1148 = vmatprep.subr.mxu0 0.0
        %1149 = vmatpush1.xpose.msra.mxu0 0.0
        %1150 = vmatprep.subr.mxu0 0.0
        %1151 = vmatpush1.xpose.msra.mxu0 0.0
        %1152 = vmatprep.subr.mxu0 0.0
        %1153 = vmatpush1.xpose.msra.mxu0 0.0
        %1154 = vmatprep.subr.mxu0 0.0
        %1155 = vmatpush1.xpose.msra.mxu0 0.0
        %1156 = vmatprep.subr.mxu0 0.0
        %1157 = vmatpush1.xpose.msra.mxu0 0.0
        %1158 = vmatprep.subr.mxu0 0.0
        %1159 = vmatpush1.xpose.msra.mxu0 0.0
        %1160 = vmatprep.subr.mxu0 0.0
        %1161 = vmatpush1.xpose.msra.mxu0 0.0
        %1162 = vmatprep.subr.mxu0 0.0
        %1163 = vmatpush1.xpose.msra.mxu0 0.0
        %1164 = vmatprep.subr.mxu0 0.0
        %1165 = vmatpush1.xpose.msra.mxu0 0.0
        %1166 = vmatprep.mubr.f32.mxu0 0.0
        %1167 = vmatmul.mubr.f32.gmra.mrb[0].mxu0 %v1088
        %v1168 = vpop.f32.mrb[0].mxu0
        %v1169 = vadd.f32 %v1085, %v1168
        %v1170 = vpop.f32.mrb[0].mxu0
        %1171 = vdwg.mxu0
        %1172 = vst.msk [vmem:[%s299] sm:$0xff] %vm317, %v1169
        %s1173 = sand.u32 %s146, 1
        %s1174 = scalar_lea.sflag [#allocation5], %s1173
        %s1175 = sand.u32 %s146, 1
        %s1176 = smul.addr %s1175, 8
        %s1177 = scalar_lea.vmem [#allocation9], %s1176
        %s1178 = sand.u32 %s172, 1
        %s1179 = scalar_lea.sflag [#allocation11], %s1178
        %s1180 = sand.u32 %s172, 1
        %s1181 = smul.addr %s1180, 32
        %s1182 = scalar_lea.vmem [#allocation10], %s1181
        // Predicated region
        $region53: #{tpu_custom_call.1} parent=39 // pred_check
          %p1183 = pneg %p156
        $region54: #{tpu_custom_call.1} parent=39 // pred_check_branch
          %1185 = sbr.rel (%p1183) target = $region56
        $region55: #{tpu_custom_call.1} parent=39 // pred_region
          %s1187 = ssub.s32 128, 128
          %1188 = vsyncadd %s1174, %s1187
          %s1189 = smul.addr %s28, 128
          %s1190 = scalar_lea.hbm %s5, %s1189
          %s1192 = sshll.u32 %s1177, 4
          %s1193 = int_to_ptr.vmem [resolvable:$true] %s1192
          %1195 = dma.vmem_to_hbm [thread:$0]  %s1193, 128, %s1190, %s1174
        $region56: #{tpu_custom_call.1} parent=39 // pred_fallthru
          _
        // Predicated region
        $region57: #{tpu_custom_call.1} parent=39 // pred_check
          %p1196 = pneg %p182
        $region58: #{tpu_custom_call.1} parent=39 // pred_check_branch
          %1198 = sbr.rel (%p1196) target = $region60
        $region59: #{tpu_custom_call.1} parent=39 // pred_region
          %s1200 = ssub.s32 512, 512
          %1201 = vsyncadd %s1179, %s1200
          %s1202 = smul.addr %s28, 4
          %s1203 = smul.addr %s1202, 128
          %s1204 = scalar_lea.hbm %s6, %s1203
          %s1205 = sshll.u32 %s1182, 4
          %s1206 = int_to_ptr.vmem [resolvable:$true] %s1205
          %1211 = dma.vmem_to_hbm [thread:$0]  %s1206, 512, %s1204, %s1179, 128, 128, 8
        $region60: #{tpu_custom_call.1} parent=39 // pred_fallthru
          _
      $region40: #{tpu_custom_call.1} parent=5 // pred_fallthru
        _
      %p1212 = scmp.le.s32.totalorder 2, %s23
      // Predicated region
      $region61: #{tpu_custom_call.1} parent=5 // pred_check
        %p1213 = pneg %p1212
      $region62: #{tpu_custom_call.1} parent=5 // pred_check_branch
        %1215 = sbr.rel (%p1213) target = $region64
      $region63: #{tpu_custom_call.1} parent=5 // pred_region
        %s1216 = ssub.s32 %s23, 2
        // Predicated region
        $region65: #{tpu_custom_call.1} parent=63 // pred_check
          %p1217 = pneg %p162
        $region66: #{tpu_custom_call.1} parent=63 // pred_check_branch
          %1219 = sbr.rel (%p1217) target = $region68
        $region67: #{tpu_custom_call.1} parent=63 // pred_region
          %s1220 = sand.u32 %s147, 1
          %s1221 = scalar_lea.sflag [#allocation5], %s1220
          %s1222 = sand.u32 %s147, 1
          %s1223 = smul.addr %s1222, 8
          %s1224 = scalar_lea.vmem [#allocation9], %s1223
          %1225 = dma.done %s1221, 128
        $region68: #{tpu_custom_call.1} parent=63 // pred_fallthru
          _
        // Predicated region
        $region69: #{tpu_custom_call.1} parent=63 // pred_check
          %p1226 = pneg %p188
        $region70: #{tpu_custom_call.1} parent=63 // pred_check_branch
          %1228 = sbr.rel (%p1226) target = $region72
        $region71: #{tpu_custom_call.1} parent=63 // pred_region
          %s1229 = sand.u32 %s173, 1
          %s1230 = scalar_lea.sflag [#allocation11], %s1229
          %s1231 = sand.u32 %s173, 1
          %s1232 = smul.addr %s1231, 32
          %s1233 = scalar_lea.vmem [#allocation10], %s1232
          %1234 = dma.done %s1230, 512
        $region72: #{tpu_custom_call.1} parent=63 // pred_fallthru
          _
      $region64: #{tpu_custom_call.1} parent=5 // pred_fallthru
        _
    $region6: #{tpu_custom_call.1} parent=1 // loop_footer
      %s27 = sadd.s32 1, %s23
    $region7: #{tpu_custom_call.1} parent=1 // loop_footer_branch
      %22 = sbr.rel target = $region3
    $region8: #{tpu_custom_call.1} parent=1 // loop_exit
      _
    %1235 = vsyncpa [#allocation4], 1
    %s1236 = scalar_lea.sflag [#allocation4], 1
    %1237 = vsyncpa %s1236, 1
    %1238 = vsyncpa [#allocation7], 1
    %1239 = vsyncpa [#allocation5], 1
    %s1240 = scalar_lea.sflag [#allocation5], 1
    %1241 = vsyncpa %s1240, 1
    %1242 = vsyncpa [#allocation11], 1
    %s1243 = scalar_lea.sflag [#allocation11], 1
    %1244 = vsyncpa %s1243, 1

</llo_original>
